<compile_context>
chip_gen: v5e
topology: v5e:2x2
jax: 0.10.0
libtpu: 0.0.40
codegen_flags: <defaults>
</compile_context>

<pallas_src>
import numpy as np

import jax
import jax.numpy as jnp
from jax.experimental import pallas as pl
from jax.experimental.pallas import tpu as pltpu


MATMUL_DTYPE = jnp.bfloat16   # MXU input dtype; accumulation stays float32


# ----------------------------- in-kernel helpers -----------------------------

def _masked_shift(x, d, h_idx, hin):
    """result[r] = x[r + d] when rows r and r + d belong to the same batch element
    (rows are stacked as r = b*hin + h); rows whose shifted source would cross a
    batch-element boundary (== the conv's H zero-padding) read as 0."""
    if d == 0:
        return x
    rows, lanes = x.shape
    z = jnp.zeros((abs(d), lanes), x.dtype)
    if d > 0:
        shifted = jnp.concatenate([x[d:, :], z], axis=0)
    else:
        shifted = jnp.concatenate([z, x[:rows + d, :]], axis=0)
    ok = jnp.logical_and(h_idx + d >= 0, h_idx + d < hin)          # (rows, 1)
    return jnp.where(ok, shifted, 0.0)


def _conv_w_pooled(xin, w_ref, b_ref, hin, pad, fuse_taps):
    """conv2d (W taps / W padding / W half of the 2x2 pool folded into the
    block-Toeplitz weight; H taps = masked row shifts) + bias.

    xin   : (bt*hin, win*cin) f32, batch stacked along rows.
    w_ref : fuse_taps -> (kh*win*cin, 2*wout*cout) bf16  (tap-major contraction)
            else      -> (kh, win*cin, 2*wout*cout) bf16 (per-tap accumulating dots)
    b_ref : (1, wout*cout) f32 bias tiled across wo.
    returns (bt*hin, wout*cout) f32: conv output, W-pooled, biased, H NOT pooled.

    NOTE: adding the bias after the W-direction max is valid only because the
    even/odd column halves carry an identical tiled bias
    (max(a, b) + c == max(a + c, b + c)).
    """
    rows, lin = xin.shape
    n = b_ref.shape[1]
    # hoisted per-layer row-within-element index for the boundary masks
    row = jax.lax.broadcasted_iota(jnp.int32, (rows, 1), 0)
    h_idx = (row & (hin - 1)) if (hin & (hin - 1)) == 0 else (row % hin)

    if fuse_taps:
        kh = w_ref.shape[0] // lin
        lhs = jnp.concatenate(
            [_masked_shift(xin, di - pad, h_idx, hin) for di in range(kh)], axis=1)
        acc = jnp.dot(lhs.astype(MATMUL_DTYPE), w_ref[...],
                      preferred_element_type=jnp.float32)
    else:
        kh = w_ref.shape[0]
        acc = jnp.zeros((rows, 2 * n), jnp.float32)
        for di in range(kh):
            lhs = _masked_shift(xin, di - pad, h_idx, hin).astype(MATMUL_DTYPE)
            acc = acc + jnp.dot(lhs, w_ref[di], preferred_element_type=jnp.float32)

    return jnp.maximum(acc[:, :n], acc[:, n:]) + b_ref[...]        # W 2x2 max + bias


def _hpool_relu(y, y_scr):
    """H-direction 2x2 max-pool + ReLU as a VPU max over strided row loads from a
    VMEM scratch (replaces the old per-layer row-selection MXU matmuls)."""
    rows, n = y.shape
    y_scr[0:rows, 0:n] = y
    even = y_scr[pl.ds(0, rows // 2, stride=2), pl.ds(0, n)]
    odd = y_scr[pl.ds(1, rows // 2, stride=2), pl.ds(0, n)]
    return jnp.maximum(jnp.maximum(even, odd), 0.0)


def _belief_cnn_kernel(x_ref, w1_ref, b1_ref, w2_ref, b2_ref, w3_ref, b3_ref,
                       wfc_ref, bfc_ref, out_ref, y_scr):
    bt = out_ref.shape[1]                      # batch elements in this grid step
    h1 = x_ref.shape[0] // bt
    h2, h3, hf = h1 // 2, h1 // 4, h1 // 8

    # (belief + 1) / 2 as in the reference module; rows are (batch, H) stacked.
    x1 = (x_ref[...] + 1.0) * 0.5                                   # (bt*h1, W)

    y1 = _conv_w_pooled(x1, w1_ref, b1_ref, h1, pad=2, fuse_taps=False)
    x2 = _hpool_relu(y1, y_scr)                                     # (bt*h2, 8W)
    y2 = _conv_w_pooled(x2, w2_ref, b2_ref, h2, pad=1, fuse_taps=True)
    x3 = _hpool_relu(y2, y_scr)                                     # (bt*h3, 8W)
    y3 = _conv_w_pooled(x3, w3_ref, b3_ref, h3, pad=1, fuse_taps=True)

    # Layer-3 H-pool + ReLU + (NCHW flatten folded into wfc) + fc, fused into a
    # single MXU dot per batch tile: gather the hf pooled rows per element with
    # strided scratch loads and concatenate them along lanes -> (bt, hf*wf*64).
    rows3, n3 = y3.shape
    y_scr[0:rows3, 0:n3] = y3
    pieces = []
    for ho in range(hf):
        ev = y_scr[pl.ds(2 * ho, bt, stride=h3), pl.ds(0, n3)]
        od = y_scr[pl.ds(2 * ho + 1, bt, stride=h3), pl.ds(0, n3)]
        pieces.append(jnp.maximum(jnp.maximum(ev, od), 0.0))
    p3 = pieces[0] if hf == 1 else jnp.concatenate(pieces, axis=1)  # (bt, hf*wf*64)

    out = jnp.dot(p3.astype(MATMUL_DTYPE), wfc_ref[...],
                  preferred_element_type=jnp.float32) + bfc_ref[...]
    out_ref[...] = jnp.maximum(out, 0.0).reshape(out_ref.shape)


# ----------------------------- pallas_call wrapper -----------------------------

def belief_map_cnn(belief, kp, *, num_batch_tiles=None):
    """belief: (B, grid_r, grid_c) in [-1, 1]  ->  f_cnn: (B, cnn_output_feature_dim)."""
    B, H, W = belief.shape
    dout = kp['bfc'].shape[-1]
    assert H % 8 == 0 and W % 8 == 0, "grid must survive three 2x2 pools"

    if num_batch_tiles is None:
        # v7x has 2 TensorCores -> give each one batch tile; on single-TC v5e/v6e
        # the extra grid step is ~0.35us (or pass num_batch_tiles=1 explicitly).
        num_batch_tiles = 2 if (B % 2 == 0 and B >= 2) else 1
    assert B % num_batch_tiles == 0
    bt = B // num_batch_tiles

    x2d = belief.reshape(B * H, W).astype(jnp.float32)

    def const_spec(a):
        nd = a.ndim
        return pl.BlockSpec(a.shape, lambda i: (0,) * nd)   # DMA'd once, reused

    # Advisory cost estimate so XLA schedules this tiny custom call sensibly.
    macs = (H * W * 16 * 25
            + (H // 2) * (W // 2) * 32 * 16 * 9
            + (H // 4) * (W // 4) * 64 * 32 * 9
            + 64 * (H // 8) * (W // 8) * dout)
    param_bytes = sum(int(np.prod(a.shape)) * a.dtype.itemsize for a in kp.values())
    cost = pl.CostEstimate(flops=2 * B * macs, transcendentals=0,
                           bytes_accessed=param_bytes + B * H * W * 4 + B * dout * 4)

    # NOTE(vmem): w2/w3 scale ~O(W^2 * cin * cout). For much larger grids, tile
    # along wout and/or set pipeline_mode=pl.Buffered(1) on the weight specs and
    # raise vmem_limit_bytes (v7x only has 64 MiB VMEM).
    out = pl.pallas_call(
        _belief_cnn_kernel,
        grid=(num_batch_tiles,),
        in_specs=[pl.BlockSpec((bt * H, W), lambda i: (i, 0)),
                  const_spec(kp['w1']), const_spec(kp['b1']),
                  const_spec(kp['w2']), const_spec(kp['b2']),
                  const_spec(kp['w3']), const_spec(kp['b3']),
                  const_spec(kp['wfc']), const_spec(kp['bfc'])],
        out_specs=pl.BlockSpec((1, bt, dout), lambda i: (i, 0, 0)),
        out_shape=jax.ShapeDtypeStruct((num_batch_tiles, bt, dout), jnp.float32),
        scratch_shapes=[pltpu.VMEM((bt * H, 8 * W), jnp.float32)],  # H-pool / fc staging
        compiler_params=pltpu.CompilerParams(dimension_semantics=("parallel",)),
        cost_estimate=cost,
    )(x2d, kp['w1'], kp['b1'], kp['w2'], kp['b2'], kp['w3'], kp['b3'],
      kp['wfc'], kp['bfc'])
    return out.reshape(B, dout)


# ------------------- weight repacking (one-time, on host) -------------------

def _build_conv_weight(k_torch, win, pad):
    """Block-Toeplitz per-tap-row weights with W-padding and the W half of the
    2x2 max-pool folded in.

    Returns (kh, win*cin, 2*wout*cout): first wout*cout output columns are the
    conv output at even spatial w (=2*wo), last wout*cout at odd (=2*wo+1)."""
    k = np.asarray(k_torch, np.float32)          # PyTorch layout (cout, cin, kh, kw)
    cout, cin, kh, kw = k.shape
    wout = win // 2
    w = np.zeros((kh, win * cin, 2 * wout * cout), np.float32)
    for di in range(kh):
        for parity in (0, 1):
            base = parity * wout * cout
            for wo in range(wout):
                w_sp = 2 * wo + parity           # spatial output column
                for dj in range(kw):
                    wi = w_sp + dj - pad         # spatial input column
                    if 0 <= wi < win:
                        w[di, wi * cin:(wi + 1) * cin,
                          base + wo * cout: base + (wo + 1) * cout] = k[:, :, di, dj].T
    return w


def pack_kernel_params(tp, grid_r, grid_c):
    assert grid_r % 8 == 0 and grid_c % 8 == 0, "grid must survive three 2x2 pools"

    def tiled_bias(b, wout):
        return jnp.asarray(np.tile(np.asarray(b, np.float32), wout)[None, :])

    w1 = _build_conv_weight(tp['c1w'], grid_c, 2)          # (5, W,   16*W) taps kept separate
    w2 = _build_conv_weight(tp['c2w'], grid_c // 2, 1)     # (3, 8*W, 16*W)
    w3 = _build_conv_weight(tp['c3w'], grid_c // 4, 1)     # (3, 8*W, 16*W)
    # conv2/conv3 taps are contracted in ONE MXU dot -> flatten tap-major so the
    # rows match the kernel's lane-concatenated LHS [tap0 | tap1 | tap2].
    w2 = w2.reshape(-1, w2.shape[-1])
    w3 = w3.reshape(-1, w3.shape[-1])

    b1 = tiled_bias(tp['c1b'], grid_c // 2)
    b2 = tiled_bias(tp['c2b'], grid_c // 4)
    b3 = tiled_bias(tp['c3b'], grid_c // 8)

    hf, wf, cl = grid_r // 8, grid_c // 8, 64
    dout = int(tp['fcw'].shape[0])
    # Fold the reference module's NCHW (c, h, w) flatten into the fc weight so the
    # kernel consumes [h-piece | h-piece | ...] x (lanes = w*c) activations directly.
    fcw = np.asarray(tp['fcw'], np.float32).reshape(dout, cl, hf, wf)
    wfc = np.transpose(fcw, (2, 3, 1, 0)).reshape(hf * wf * cl, dout)
    bfc = jnp.asarray(np.asarray(tp['fcb'], np.float32)[None, :])

    cast = lambda a: jnp.asarray(a, MATMUL_DTYPE)           # bf16 MXU inputs
    return dict(w1=cast(w1), b1=b1, w2=cast(w2), b2=b2, w3=cast(w3), b3=b3,
                wfc=cast(wfc), bfc=bfc)


# ----------------------------- params / reference -----------------------------

def init_torch_params(key, grid_r, grid_c, cnn_out_dim):
    ks = jax.random.split(key, 8)

    def rnd(k, shape, scale):
        return jax.random.normal(k, shape, jnp.float32) * scale

    flat = 64 * (grid_r // 8) * (grid_c // 8)
    return dict(
        c1w=rnd(ks[0], (16, 1, 5, 5), 0.1),  c1b=rnd(ks[1], (16,), 0.01),
        c2w=rnd(ks[2], (32, 16, 3, 3), 0.1), c2b=rnd(ks[3], (32,), 0.01),
        c3w=rnd(ks[4], (64, 32, 3, 3), 0.1), c3b=rnd(ks[5], (64,), 0.01),
        fcw=rnd(ks[6], (cnn_out_dim, flat), 0.1), fcb=rnd(ks[7], (cnn_out_dim,), 0.01))


def reference_cnn(belief, tp):
    """Pure-XLA reference identical to BeliefMapCNN.forward (numeric check)."""
    x = ((belief + 1.0) / 2.0)[:, None, :, :]

    def conv(x, w, b, pad):
        y = jax.lax.conv_general_dilated(
            x, w, (1, 1), [(pad, pad), (pad, pad)],
            dimension_numbers=('NCHW', 'OIHW', 'NCHW'))
        return y + b[None, :, None, None]

    def pool(x):
        return jax.lax.reduce_window(x, -jnp.inf, jax.lax.max,
                                     (1, 1, 2, 2), (1, 1, 2, 2), 'VALID')

    x = jax.nn.relu(pool(conv(x, tp['c1w'], tp['c1b'], 2)))
    x = jax.nn.relu(pool(conv(x, tp['c2w'], tp['c2b'], 1)))
    x = jax.nn.relu(pool(conv(x, tp['c3w'], tp['c3b'], 1)))
    x = x.reshape(x.shape[0], -1)
    return jax.nn.relu(x @ tp['fcw'].T + tp['fcb'])


# ----------------------------- main -----------------------------

if __name__ == "__main__":
    GRID_R, GRID_C, CNN_OUT, B = 16, 16, 32, 8

    key = jax.random.PRNGKey(0)
    k_params, k_belief = jax.random.split(key)

    torch_params = init_torch_params(k_params, GRID_R, GRID_C, CNN_OUT)
    kernel_params = pack_kernel_params(torch_params, GRID_R, GRID_C)

    belief = jax.random.uniform(k_belief, (B, GRID_R, GRID_C), jnp.float32,
                                minval=-1.0, maxval=1.0)

    f_cnn = jax.jit(belief_map_cnn)(belief, kernel_params)
    jax.block_until_ready(f_cnn)

    assert f_cnn.shape == (B, CNN_OUT)
    assert bool(jnp.all(jnp.isfinite(f_cnn)))

    # bf16 MXU inputs (f32 accumulation) vs. the pure-f32 XLA reference -> use a
    # bf16-appropriate tolerance.
    ref = reference_cnn(belief, torch_params)
    np.testing.assert_allclose(np.asarray(f_cnn), np.asarray(ref), rtol=2e-2, atol=2e-2)

    print("KERNEL_OK")
</pallas_src>

<mosaic_0001>
module attributes {stable_mosaic.version = 11 : i64} {
  func.func @_belief_cnn_kernel(%arg0: i32, %arg1: memref<64x16xf32, #tpu.memory_space<vmem>>, %arg2: memref<5x16x256xbf16, #tpu.memory_space<vmem>>, %arg3: memref<1x128xf32, #tpu.memory_space<vmem>>, %arg4: memref<384x256xbf16, #tpu.memory_space<vmem>>, %arg5: memref<1x128xf32, #tpu.memory_space<vmem>>, %arg6: memref<384x256xbf16, #tpu.memory_space<vmem>>, %arg7: memref<1x128xf32, #tpu.memory_space<vmem>>, %arg8: memref<256x32xbf16, #tpu.memory_space<vmem>>, %arg9: memref<1x32xf32, #tpu.memory_space<vmem>>, %arg10: memref<1x4x32xf32, #tpu.memory_space<vmem>>, %arg11: memref<64x128xf32, #tpu.memory_space<vmem>>) attributes {dimension_semantics = [#tpu.dimension_semantics<parallel>], iteration_bounds = array<i64: 2>, scalar_prefetch = 0 : i64, scratch_operands = 1 : i64, tpu.core_type = #tpu.core_type<tc>, window_params = [{transform_indices = @transform_0, window_bounds = array<i64: 64, 16>}, {pipeline_mode = #tpu.pipeline_mode<synchronous>, transform_indices = @transform_1, window_bounds = array<i64: 5, 16, 256>}, {pipeline_mode = #tpu.pipeline_mode<synchronous>, transform_indices = @transform_2, window_bounds = array<i64: 1, 128>}, {pipeline_mode = #tpu.pipeline_mode<synchronous>, transform_indices = @transform_3, window_bounds = array<i64: 384, 256>}, {pipeline_mode = #tpu.pipeline_mode<synchronous>, transform_indices = @transform_4, window_bounds = array<i64: 1, 128>}, {pipeline_mode = #tpu.pipeline_mode<synchronous>, transform_indices = @transform_5, window_bounds = array<i64: 384, 256>}, {pipeline_mode = #tpu.pipeline_mode<synchronous>, transform_indices = @transform_6, window_bounds = array<i64: 1, 128>}, {pipeline_mode = #tpu.pipeline_mode<synchronous>, transform_indices = @transform_7, window_bounds = array<i64: 256, 32>}, {pipeline_mode = #tpu.pipeline_mode<synchronous>, transform_indices = @transform_8, window_bounds = array<i64: 1, 32>}, {transform_indices = @transform_9, window_bounds = array<i64: 1, 4, 32>}]} {
    %c0 = arith.constant 0 : index
    %c0_0 = arith.constant 0 : index
    %0 = vector.load %arg1[%c0, %c0_0] : memref<64x16xf32, #tpu.memory_space<vmem>>, vector<64x16xf32>
    %cst = arith.constant 1.000000e+00 : f32
    %1 = vector.broadcast %cst : f32 to vector<64x16xf32>
    %2 = arith.addf %0, %1 : vector<64x16xf32>
    %cst_1 = arith.constant 5.000000e-01 : f32
    %3 = vector.broadcast %cst_1 : f32 to vector<64x16xf32>
    %4 = arith.mulf %2, %3 : vector<64x16xf32>
    %5 = tpu.iota {dimensions = array<i32: 0>} : vector<64x1xi32>
    %c15_i32 = arith.constant 15 : i32
    %6 = vector.broadcast %c15_i32 : i32 to vector<64x1xi32>
    %7 = arith.andi %5, %6 : vector<64x1xi32>
    %cst_2 = arith.constant 0.000000e+00 : f32
    %8 = vector.broadcast %cst_2 : f32 to vector<64x256xf32>
    %cst_3 = arith.constant 0.000000e+00 : f32
    %9 = vector.broadcast %cst_3 : f32 to vector<2x16xf32>
    %10 = vector.extract_strided_slice %4 {offsets = [0, 0], sizes = [62, 16], strides = [1, 1]} : vector<64x16xf32> to vector<62x16xf32>
    %11 = tpu.concatenate %9, %10 in 0 : vector<2x16xf32>, vector<62x16xf32> -> vector<64x16xf32>
    %c-2_i32 = arith.constant -2 : i32
    %12 = vector.broadcast %c-2_i32 : i32 to vector<64x1xi32>
    %13 = arith.addi %7, %12 : vector<64x1xi32>
    %c0_i32 = arith.constant 0 : i32
    %14 = vector.broadcast %c0_i32 : i32 to vector<64x1xi32>
    %15 = arith.cmpi sge, %13, %14 : vector<64x1xi32>
    %c-2_i32_4 = arith.constant -2 : i32
    %16 = vector.broadcast %c-2_i32_4 : i32 to vector<64x1xi32>
    %17 = arith.addi %7, %16 : vector<64x1xi32>
    %c16_i32 = arith.constant 16 : i32
    %18 = vector.broadcast %c16_i32 : i32 to vector<64x1xi32>
    %19 = arith.cmpi slt, %17, %18 : vector<64x1xi32>
    %20 = arith.andi %15, %19 : vector<64x1xi1>
    %cst_5 = arith.constant 0.000000e+00 : f32
    %21 = vector.shape_cast %20 : vector<64x1xi1> to vector<64x1xi1>
    %22 = vector.broadcast %21 : vector<64x1xi1> to vector<64x16xi1>
    %23 = vector.broadcast %cst_5 : f32 to vector<64x16xf32>
    %24 = arith.select %22, %11, %23 : vector<64x16xi1>, vector<64x16xf32>
    %25 = arith.truncf %24 : vector<64x16xf32> to vector<64x16xbf16>
    %c0_6 = arith.constant 0 : index
    %c0_7 = arith.constant 0 : index
    %c0_8 = arith.constant 0 : index
    %26 = vector.load %arg2[%c0_6, %c0_7, %c0_8] : memref<5x16x256xbf16, #tpu.memory_space<vmem>>, vector<1x16x256xbf16>
    %27 = vector.shape_cast %26 : vector<1x16x256xbf16> to vector<16x256xbf16>
    %cst_9 = arith.constant dense<0.000000e+00> : vector<64x256xf32>
    %28 = tpu.matmul %25, %27, %cst_9 {dimension_numbers = #tpu.dot_dimension_numbers<[1], [0], [0], [1], [0, 0, 1, 1], [], []>} : vector<64x16xbf16>, vector<16x256xbf16>, vector<64x256xf32> -> vector<64x256xf32>
    %29 = arith.addf %8, %28 : vector<64x256xf32>
    %cst_10 = arith.constant 0.000000e+00 : f32
    %30 = vector.broadcast %cst_10 : f32 to vector<1x16xf32>
    %31 = vector.extract_strided_slice %4 {offsets = [0, 0], sizes = [63, 16], strides = [1, 1]} : vector<64x16xf32> to vector<63x16xf32>
    %32 = tpu.concatenate %30, %31 in 0 : vector<1x16xf32>, vector<63x16xf32> -> vector<64x16xf32>
    %c-1_i32 = arith.constant -1 : i32
    %33 = vector.broadcast %c-1_i32 : i32 to vector<64x1xi32>
    %34 = arith.addi %7, %33 : vector<64x1xi32>
    %c0_i32_11 = arith.constant 0 : i32
    %35 = vector.broadcast %c0_i32_11 : i32 to vector<64x1xi32>
    %36 = arith.cmpi sge, %34, %35 : vector<64x1xi32>
    %c-1_i32_12 = arith.constant -1 : i32
    %37 = vector.broadcast %c-1_i32_12 : i32 to vector<64x1xi32>
    %38 = arith.addi %7, %37 : vector<64x1xi32>
    %c16_i32_13 = arith.constant 16 : i32
    %39 = vector.broadcast %c16_i32_13 : i32 to vector<64x1xi32>
    %40 = arith.cmpi slt, %38, %39 : vector<64x1xi32>
    %41 = arith.andi %36, %40 : vector<64x1xi1>
    %cst_14 = arith.constant 0.000000e+00 : f32
    %42 = vector.shape_cast %41 : vector<64x1xi1> to vector<64x1xi1>
    %43 = vector.broadcast %42 : vector<64x1xi1> to vector<64x16xi1>
    %44 = vector.broadcast %cst_14 : f32 to vector<64x16xf32>
    %45 = arith.select %43, %32, %44 : vector<64x16xi1>, vector<64x16xf32>
    %46 = arith.truncf %45 : vector<64x16xf32> to vector<64x16xbf16>
    %c1 = arith.constant 1 : index
    %c0_15 = arith.constant 0 : index
    %c0_16 = arith.constant 0 : index
    %47 = vector.load %arg2[%c1, %c0_15, %c0_16] : memref<5x16x256xbf16, #tpu.memory_space<vmem>>, vector<1x16x256xbf16>
    %48 = vector.shape_cast %47 : vector<1x16x256xbf16> to vector<16x256xbf16>
    %cst_17 = arith.constant dense<0.000000e+00> : vector<64x256xf32>
    %49 = tpu.matmul %46, %48, %cst_17 {dimension_numbers = #tpu.dot_dimension_numbers<[1], [0], [0], [1], [0, 0, 1, 1], [], []>} : vector<64x16xbf16>, vector<16x256xbf16>, vector<64x256xf32> -> vector<64x256xf32>
    %50 = arith.addf %29, %49 : vector<64x256xf32>
    %51 = arith.truncf %4 : vector<64x16xf32> to vector<64x16xbf16>
    %c2 = arith.constant 2 : index
    %c0_18 = arith.constant 0 : index
    %c0_19 = arith.constant 0 : index
    %52 = vector.load %arg2[%c2, %c0_18, %c0_19] : memref<5x16x256xbf16, #tpu.memory_space<vmem>>, vector<1x16x256xbf16>
    %53 = vector.shape_cast %52 : vector<1x16x256xbf16> to vector<16x256xbf16>
    %cst_20 = arith.constant dense<0.000000e+00> : vector<64x256xf32>
    %54 = tpu.matmul %51, %53, %cst_20 {dimension_numbers = #tpu.dot_dimension_numbers<[1], [0], [0], [1], [0, 0, 1, 1], [], []>} : vector<64x16xbf16>, vector<16x256xbf16>, vector<64x256xf32> -> vector<64x256xf32>
    %55 = arith.addf %50, %54 : vector<64x256xf32>
    %cst_21 = arith.constant 0.000000e+00 : f32
    %56 = vector.broadcast %cst_21 : f32 to vector<1x16xf32>
    %57 = vector.extract_strided_slice %4 {offsets = [1, 0], sizes = [63, 16], strides = [1, 1]} : vector<64x16xf32> to vector<63x16xf32>
    %58 = tpu.concatenate %57, %56 in 0 : vector<63x16xf32>, vector<1x16xf32> -> vector<64x16xf32>
    %c1_i32 = arith.constant 1 : i32
    %59 = vector.broadcast %c1_i32 : i32 to vector<64x1xi32>
    %60 = arith.addi %7, %59 : vector<64x1xi32>
    %c0_i32_22 = arith.constant 0 : i32
    %61 = vector.broadcast %c0_i32_22 : i32 to vector<64x1xi32>
    %62 = arith.cmpi sge, %60, %61 : vector<64x1xi32>
    %c1_i32_23 = arith.constant 1 : i32
    %63 = vector.broadcast %c1_i32_23 : i32 to vector<64x1xi32>
    %64 = arith.addi %7, %63 : vector<64x1xi32>
    %c16_i32_24 = arith.constant 16 : i32
    %65 = vector.broadcast %c16_i32_24 : i32 to vector<64x1xi32>
    %66 = arith.cmpi slt, %64, %65 : vector<64x1xi32>
    %67 = arith.andi %62, %66 : vector<64x1xi1>
    %cst_25 = arith.constant 0.000000e+00 : f32
    %68 = vector.shape_cast %67 : vector<64x1xi1> to vector<64x1xi1>
    %69 = vector.broadcast %68 : vector<64x1xi1> to vector<64x16xi1>
    %70 = vector.broadcast %cst_25 : f32 to vector<64x16xf32>
    %71 = arith.select %69, %58, %70 : vector<64x16xi1>, vector<64x16xf32>
    %72 = arith.truncf %71 : vector<64x16xf32> to vector<64x16xbf16>
    %c3 = arith.constant 3 : index
    %c0_26 = arith.constant 0 : index
    %c0_27 = arith.constant 0 : index
    %73 = vector.load %arg2[%c3, %c0_26, %c0_27] : memref<5x16x256xbf16, #tpu.memory_space<vmem>>, vector<1x16x256xbf16>
    %74 = vector.shape_cast %73 : vector<1x16x256xbf16> to vector<16x256xbf16>
    %cst_28 = arith.constant dense<0.000000e+00> : vector<64x256xf32>
    %75 = tpu.matmul %72, %74, %cst_28 {dimension_numbers = #tpu.dot_dimension_numbers<[1], [0], [0], [1], [0, 0, 1, 1], [], []>} : vector<64x16xbf16>, vector<16x256xbf16>, vector<64x256xf32> -> vector<64x256xf32>
    %76 = arith.addf %55, %75 : vector<64x256xf32>
    %cst_29 = arith.constant 0.000000e+00 : f32
    %77 = vector.broadcast %cst_29 : f32 to vector<2x16xf32>
    %78 = vector.extract_strided_slice %4 {offsets = [2, 0], sizes = [62, 16], strides = [1, 1]} : vector<64x16xf32> to vector<62x16xf32>
    %79 = tpu.concatenate %78, %77 in 0 : vector<62x16xf32>, vector<2x16xf32> -> vector<64x16xf32>
    %c2_i32 = arith.constant 2 : i32
    %80 = vector.broadcast %c2_i32 : i32 to vector<64x1xi32>
    %81 = arith.addi %7, %80 : vector<64x1xi32>
    %c0_i32_30 = arith.constant 0 : i32
    %82 = vector.broadcast %c0_i32_30 : i32 to vector<64x1xi32>
    %83 = arith.cmpi sge, %81, %82 : vector<64x1xi32>
    %c2_i32_31 = arith.constant 2 : i32
    %84 = vector.broadcast %c2_i32_31 : i32 to vector<64x1xi32>
    %85 = arith.addi %7, %84 : vector<64x1xi32>
    %c16_i32_32 = arith.constant 16 : i32
    %86 = vector.broadcast %c16_i32_32 : i32 to vector<64x1xi32>
    %87 = arith.cmpi slt, %85, %86 : vector<64x1xi32>
    %88 = arith.andi %83, %87 : vector<64x1xi1>
    %cst_33 = arith.constant 0.000000e+00 : f32
    %89 = vector.shape_cast %88 : vector<64x1xi1> to vector<64x1xi1>
    %90 = vector.broadcast %89 : vector<64x1xi1> to vector<64x16xi1>
    %91 = vector.broadcast %cst_33 : f32 to vector<64x16xf32>
    %92 = arith.select %90, %79, %91 : vector<64x16xi1>, vector<64x16xf32>
    %93 = arith.truncf %92 : vector<64x16xf32> to vector<64x16xbf16>
    %c4 = arith.constant 4 : index
    %c0_34 = arith.constant 0 : index
    %c0_35 = arith.constant 0 : index
    %94 = vector.load %arg2[%c4, %c0_34, %c0_35] : memref<5x16x256xbf16, #tpu.memory_space<vmem>>, vector<1x16x256xbf16>
    %95 = vector.shape_cast %94 : vector<1x16x256xbf16> to vector<16x256xbf16>
    %cst_36 = arith.constant dense<0.000000e+00> : vector<64x256xf32>
    %96 = tpu.matmul %93, %95, %cst_36 {dimension_numbers = #tpu.dot_dimension_numbers<[1], [0], [0], [1], [0, 0, 1, 1], [], []>} : vector<64x16xbf16>, vector<16x256xbf16>, vector<64x256xf32> -> vector<64x256xf32>
    %97 = arith.addf %76, %96 : vector<64x256xf32>
    %98 = vector.extract_strided_slice %97 {offsets = [0, 0], sizes = [64, 128], strides = [1, 1]} : vector<64x256xf32> to vector<64x128xf32>
    %99 = vector.extract_strided_slice %97 {offsets = [0, 128], sizes = [64, 128], strides = [1, 1]} : vector<64x256xf32> to vector<64x128xf32>
    %100 = arith.maximumf %98, %99 : vector<64x128xf32>
    %c0_37 = arith.constant 0 : index
    %c0_38 = arith.constant 0 : index
    %101 = vector.load %arg3[%c0_37, %c0_38] : memref<1x128xf32, #tpu.memory_space<vmem>>, vector<1x128xf32>
    %102 = vector.broadcast %101 : vector<1x128xf32> to vector<64x128xf32>
    %103 = arith.addf %100, %102 : vector<64x128xf32>
    %c0_39 = arith.constant 0 : index
    %c0_40 = arith.constant 0 : index
    %104 = vector.load %arg11[%c0_39, %c0_40] : memref<64x128xf32, #tpu.memory_space<vmem>>, vector<64x128xf32>
    tpu.vector_store %arg11[%c0_39, %c0_40], %103 {strides = array<i32>} : memref<64x128xf32, #tpu.memory_space<vmem>>, vector<64x128xf32>,
    %c0_41 = arith.constant 0 : index
    %c0_42 = arith.constant 0 : index
    %105 = tpu.strided_load %arg11[%c0_41, %c0_42] {strides = array<i32: 2, 1>} : memref<64x128xf32, #tpu.memory_space<vmem>>, vector<32x128xf32>
    %c1_43 = arith.constant 1 : index
    %c0_44 = arith.constant 0 : index
    %106 = tpu.strided_load %arg11[%c1_43, %c0_44] {strides = array<i32: 2, 1>} : memref<64x128xf32, #tpu.memory_space<vmem>>, vector<32x128xf32>
    %107 = arith.maximumf %105, %106 : vector<32x128xf32>
    %cst_45 = arith.constant 0.000000e+00 : f32
    %108 = vector.broadcast %cst_45 : f32 to vector<32x128xf32>
    %109 = arith.maximumf %107, %108 : vector<32x128xf32>
    %110 = tpu.iota {dimensions = array<i32: 0>} : vector<32x1xi32>
    %c7_i32 = arith.constant 7 : i32
    %111 = vector.broadcast %c7_i32 : i32 to vector<32x1xi32>
    %112 = arith.andi %110, %111 : vector<32x1xi32>
    %cst_46 = arith.constant 0.000000e+00 : f32
    %113 = vector.broadcast %cst_46 : f32 to vector<1x128xf32>
    %114 = vector.extract_strided_slice %109 {offsets = [0, 0], sizes = [31, 128], strides = [1, 1]} : vector<32x128xf32> to vector<31x128xf32>
    %115 = tpu.concatenate %113, %114 in 0 : vector<1x128xf32>, vector<31x128xf32> -> vector<32x128xf32>
    %c-1_i32_47 = arith.constant -1 : i32
    %116 = vector.broadcast %c-1_i32_47 : i32 to vector<32x1xi32>
    %117 = arith.addi %112, %116 : vector<32x1xi32>
    %c0_i32_48 = arith.constant 0 : i32
    %118 = vector.broadcast %c0_i32_48 : i32 to vector<32x1xi32>
    %119 = arith.cmpi sge, %117, %118 : vector<32x1xi32>
    %c-1_i32_49 = arith.constant -1 : i32
    %120 = vector.broadcast %c-1_i32_49 : i32 to vector<32x1xi32>
    %121 = arith.addi %112, %120 : vector<32x1xi32>
    %c8_i32 = arith.constant 8 : i32
    %122 = vector.broadcast %c8_i32 : i32 to vector<32x1xi32>
    %123 = arith.cmpi slt, %121, %122 : vector<32x1xi32>
    %124 = arith.andi %119, %123 : vector<32x1xi1>
    %cst_50 = arith.constant 0.000000e+00 : f32
    %125 = vector.shape_cast %124 : vector<32x1xi1> to vector<32x1xi1>
    %126 = vector.broadcast %125 : vector<32x1xi1> to vector<32x128xi1>
    %127 = vector.broadcast %cst_50 : f32 to vector<32x128xf32>
    %128 = arith.select %126, %115, %127 : vector<32x128xi1>, vector<32x128xf32>
    %cst_51 = arith.constant 0.000000e+00 : f32
    %129 = vector.broadcast %cst_51 : f32 to vector<1x128xf32>
    %130 = vector.extract_strided_slice %109 {offsets = [1, 0], sizes = [31, 128], strides = [1, 1]} : vector<32x128xf32> to vector<31x128xf32>
    %131 = tpu.concatenate %130, %129 in 0 : vector<31x128xf32>, vector<1x128xf32> -> vector<32x128xf32>
    %c1_i32_52 = arith.constant 1 : i32
    %132 = vector.broadcast %c1_i32_52 : i32 to vector<32x1xi32>
    %133 = arith.addi %112, %132 : vector<32x1xi32>
    %c0_i32_53 = arith.constant 0 : i32
    %134 = vector.broadcast %c0_i32_53 : i32 to vector<32x1xi32>
    %135 = arith.cmpi sge, %133, %134 : vector<32x1xi32>
    %c1_i32_54 = arith.constant 1 : i32
    %136 = vector.broadcast %c1_i32_54 : i32 to vector<32x1xi32>
    %137 = arith.addi %112, %136 : vector<32x1xi32>
    %c8_i32_55 = arith.constant 8 : i32
    %138 = vector.broadcast %c8_i32_55 : i32 to vector<32x1xi32>
    %139 = arith.cmpi slt, %137, %138 : vector<32x1xi32>
    %140 = arith.andi %135, %139 : vector<32x1xi1>
    %cst_56 = arith.constant 0.000000e+00 : f32
    %141 = vector.shape_cast %140 : vector<32x1xi1> to vector<32x1xi1>
    %142 = vector.broadcast %141 : vector<32x1xi1> to vector<32x128xi1>
    %143 = vector.broadcast %cst_56 : f32 to vector<32x128xf32>
    %144 = arith.select %142, %131, %143 : vector<32x128xi1>, vector<32x128xf32>
    %145 = tpu.concatenate %128, %109, %144 in 1 : vector<32x128xf32>, vector<32x128xf32>, vector<32x128xf32> -> vector<32x384xf32>
    %146 = arith.truncf %145 : vector<32x384xf32> to vector<32x384xbf16>
    %c0_57 = arith.constant 0 : index
    %c0_58 = arith.constant 0 : index
    %147 = vector.load %arg4[%c0_57, %c0_58] : memref<384x256xbf16, #tpu.memory_space<vmem>>, vector<384x256xbf16>
    %cst_59 = arith.constant dense<0.000000e+00> : vector<32x256xf32>
    %148 = tpu.matmul %146, %147, %cst_59 {dimension_numbers = #tpu.dot_dimension_numbers<[1], [0], [0], [1], [0, 0, 1, 1], [], []>} : vector<32x384xbf16>, vector<384x256xbf16>, vector<32x256xf32> -> vector<32x256xf32>
    %149 = vector.extract_strided_slice %148 {offsets = [0, 0], sizes = [32, 128], strides = [1, 1]} : vector<32x256xf32> to vector<32x128xf32>
    %150 = vector.extract_strided_slice %148 {offsets = [0, 128], sizes = [32, 128], strides = [1, 1]} : vector<32x256xf32> to vector<32x128xf32>
    %151 = arith.maximumf %149, %150 : vector<32x128xf32>
    %c0_60 = arith.constant 0 : index
    %c0_61 = arith.constant 0 : index
    %152 = vector.load %arg5[%c0_60, %c0_61] : memref<1x128xf32, #tpu.memory_space<vmem>>, vector<1x128xf32>
    %153 = vector.broadcast %152 : vector<1x128xf32> to vector<32x128xf32>
    %154 = arith.addf %151, %153 : vector<32x128xf32>
    %c0_62 = arith.constant 0 : index
    %c0_63 = arith.constant 0 : index
    %155 = vector.load %arg11[%c0_62, %c0_63] : memref<64x128xf32, #tpu.memory_space<vmem>>, vector<32x128xf32>
    tpu.vector_store %arg11[%c0_62, %c0_63], %154 {strides = array<i32>} : memref<64x128xf32, #tpu.memory_space<vmem>>, vector<32x128xf32>,
    %c0_64 = arith.constant 0 : index
    %c0_65 = arith.constant 0 : index
    %156 = tpu.strided_load %arg11[%c0_64, %c0_65] {strides = array<i32: 2, 1>} : memref<64x128xf32, #tpu.memory_space<vmem>>, vector<16x128xf32>
    %c1_66 = arith.constant 1 : index
    %c0_67 = arith.constant 0 : index
    %157 = tpu.strided_load %arg11[%c1_66, %c0_67] {strides = array<i32: 2, 1>} : memref<64x128xf32, #tpu.memory_space<vmem>>, vector<16x128xf32>
    %158 = arith.maximumf %156, %157 : vector<16x128xf32>
    %cst_68 = arith.constant 0.000000e+00 : f32
    %159 = vector.broadcast %cst_68 : f32 to vector<16x128xf32>
    %160 = arith.maximumf %158, %159 : vector<16x128xf32>
    %161 = tpu.iota {dimensions = array<i32: 0>} : vector<16x1xi32>
    %c3_i32 = arith.constant 3 : i32
    %162 = vector.broadcast %c3_i32 : i32 to vector<16x1xi32>
    %163 = arith.andi %161, %162 : vector<16x1xi32>
    %cst_69 = arith.constant 0.000000e+00 : f32
    %164 = vector.broadcast %cst_69 : f32 to vector<1x128xf32>
    %165 = vector.extract_strided_slice %160 {offsets = [0, 0], sizes = [15, 128], strides = [1, 1]} : vector<16x128xf32> to vector<15x128xf32>
    %166 = tpu.concatenate %164, %165 in 0 : vector<1x128xf32>, vector<15x128xf32> -> vector<16x128xf32>
    %c-1_i32_70 = arith.constant -1 : i32
    %167 = vector.broadcast %c-1_i32_70 : i32 to vector<16x1xi32>
    %168 = arith.addi %163, %167 : vector<16x1xi32>
    %c0_i32_71 = arith.constant 0 : i32
    %169 = vector.broadcast %c0_i32_71 : i32 to vector<16x1xi32>
    %170 = arith.cmpi sge, %168, %169 : vector<16x1xi32>
    %c-1_i32_72 = arith.constant -1 : i32
    %171 = vector.broadcast %c-1_i32_72 : i32 to vector<16x1xi32>
    %172 = arith.addi %163, %171 : vector<16x1xi32>
    %c4_i32 = arith.constant 4 : i32
    %173 = vector.broadcast %c4_i32 : i32 to vector<16x1xi32>
    %174 = arith.cmpi slt, %172, %173 : vector<16x1xi32>
    %175 = arith.andi %170, %174 : vector<16x1xi1>
    %cst_73 = arith.constant 0.000000e+00 : f32
    %176 = vector.shape_cast %175 : vector<16x1xi1> to vector<16x1xi1>
    %177 = vector.broadcast %176 : vector<16x1xi1> to vector<16x128xi1>
    %178 = vector.broadcast %cst_73 : f32 to vector<16x128xf32>
    %179 = arith.select %177, %166, %178 : vector<16x128xi1>, vector<16x128xf32>
    %cst_74 = arith.constant 0.000000e+00 : f32
    %180 = vector.broadcast %cst_74 : f32 to vector<1x128xf32>
    %181 = vector.extract_strided_slice %160 {offsets = [1, 0], sizes = [15, 128], strides = [1, 1]} : vector<16x128xf32> to vector<15x128xf32>
    %182 = tpu.concatenate %181, %180 in 0 : vector<15x128xf32>, vector<1x128xf32> -> vector<16x128xf32>
    %c1_i32_75 = arith.constant 1 : i32
    %183 = vector.broadcast %c1_i32_75 : i32 to vector<16x1xi32>
    %184 = arith.addi %163, %183 : vector<16x1xi32>
    %c0_i32_76 = arith.constant 0 : i32
    %185 = vector.broadcast %c0_i32_76 : i32 to vector<16x1xi32>
    %186 = arith.cmpi sge, %184, %185 : vector<16x1xi32>
    %c1_i32_77 = arith.constant 1 : i32
    %187 = vector.broadcast %c1_i32_77 : i32 to vector<16x1xi32>
    %188 = arith.addi %163, %187 : vector<16x1xi32>
    %c4_i32_78 = arith.constant 4 : i32
    %189 = vector.broadcast %c4_i32_78 : i32 to vector<16x1xi32>
    %190 = arith.cmpi slt, %188, %189 : vector<16x1xi32>
    %191 = arith.andi %186, %190 : vector<16x1xi1>
    %cst_79 = arith.constant 0.000000e+00 : f32
    %192 = vector.shape_cast %191 : vector<16x1xi1> to vector<16x1xi1>
    %193 = vector.broadcast %192 : vector<16x1xi1> to vector<16x128xi1>
    %194 = vector.broadcast %cst_79 : f32 to vector<16x128xf32>
    %195 = arith.select %193, %182, %194 : vector<16x128xi1>, vector<16x128xf32>
    %196 = tpu.concatenate %179, %160, %195 in 1 : vector<16x128xf32>, vector<16x128xf32>, vector<16x128xf32> -> vector<16x384xf32>
    %197 = arith.truncf %196 : vector<16x384xf32> to vector<16x384xbf16>
    %c0_80 = arith.constant 0 : index
    %c0_81 = arith.constant 0 : index
    %198 = vector.load %arg6[%c0_80, %c0_81] : memref<384x256xbf16, #tpu.memory_space<vmem>>, vector<384x256xbf16>
    %cst_82 = arith.constant dense<0.000000e+00> : vector<16x256xf32>
    %199 = tpu.matmul %197, %198, %cst_82 {dimension_numbers = #tpu.dot_dimension_numbers<[1], [0], [0], [1], [0, 0, 1, 1], [], []>} : vector<16x384xbf16>, vector<384x256xbf16>, vector<16x256xf32> -> vector<16x256xf32>
    %200 = vector.extract_strided_slice %199 {offsets = [0, 0], sizes = [16, 128], strides = [1, 1]} : vector<16x256xf32> to vector<16x128xf32>
    %201 = vector.extract_strided_slice %199 {offsets = [0, 128], sizes = [16, 128], strides = [1, 1]} : vector<16x256xf32> to vector<16x128xf32>
    %202 = arith.maximumf %200, %201 : vector<16x128xf32>
    %c0_83 = arith.constant 0 : index
    %c0_84 = arith.constant 0 : index
    %203 = vector.load %arg7[%c0_83, %c0_84] : memref<1x128xf32, #tpu.memory_space<vmem>>, vector<1x128xf32>
    %204 = vector.broadcast %203 : vector<1x128xf32> to vector<16x128xf32>
    %205 = arith.addf %202, %204 : vector<16x128xf32>
    %c0_85 = arith.constant 0 : index
    %c0_86 = arith.constant 0 : index
    %206 = vector.load %arg11[%c0_85, %c0_86] : memref<64x128xf32, #tpu.memory_space<vmem>>, vector<16x128xf32>
    tpu.vector_store %arg11[%c0_85, %c0_86], %205 {strides = array<i32>} : memref<64x128xf32, #tpu.memory_space<vmem>>, vector<16x128xf32>,
    %c0_87 = arith.constant 0 : index
    %c0_88 = arith.constant 0 : index
    %207 = tpu.strided_load %arg11[%c0_87, %c0_88] {strides = array<i32: 4, 1>} : memref<64x128xf32, #tpu.memory_space<vmem>>, vector<4x128xf32>
    %c1_89 = arith.constant 1 : index
    %c0_90 = arith.constant 0 : index
    %208 = tpu.strided_load %arg11[%c1_89, %c0_90] {strides = array<i32: 4, 1>} : memref<64x128xf32, #tpu.memory_space<vmem>>, vector<4x128xf32>
    %209 = arith.maximumf %207, %208 : vector<4x128xf32>
    %cst_91 = arith.constant 0.000000e+00 : f32
    %210 = vector.broadcast %cst_91 : f32 to vector<4x128xf32>
    %211 = arith.maximumf %209, %210 : vector<4x128xf32>
    %c2_92 = arith.constant 2 : index
    %c0_93 = arith.constant 0 : index
    %212 = tpu.strided_load %arg11[%c2_92, %c0_93] {strides = array<i32: 4, 1>} : memref<64x128xf32, #tpu.memory_space<vmem>>, vector<4x128xf32>
    %c3_94 = arith.constant 3 : index
    %c0_95 = arith.constant 0 : index
    %213 = tpu.strided_load %arg11[%c3_94, %c0_95] {strides = array<i32: 4, 1>} : memref<64x128xf32, #tpu.memory_space<vmem>>, vector<4x128xf32>
    %214 = arith.maximumf %212, %213 : vector<4x128xf32>
    %cst_96 = arith.constant 0.000000e+00 : f32
    %215 = vector.broadcast %cst_96 : f32 to vector<4x128xf32>
    %216 = arith.maximumf %214, %215 : vector<4x128xf32>
    %217 = tpu.concatenate %211, %216 in 1 : vector<4x128xf32>, vector<4x128xf32> -> vector<4x256xf32>
    %218 = arith.truncf %217 : vector<4x256xf32> to vector<4x256xbf16>
    %c0_97 = arith.constant 0 : index
    %c0_98 = arith.constant 0 : index
    %219 = vector.load %arg8[%c0_97, %c0_98] : memref<256x32xbf16, #tpu.memory_space<vmem>>, vector<256x32xbf16>
    %cst_99 = arith.constant dense<0.000000e+00> : vector<4x32xf32>
    %220 = tpu.matmul %218, %219, %cst_99 {dimension_numbers = #tpu.dot_dimension_numbers<[1], [0], [0], [1], [0, 0, 1, 1], [], []>} : vector<4x256xbf16>, vector<256x32xbf16>, vector<4x32xf32> -> vector<4x32xf32>
    %c0_100 = arith.constant 0 : index
    %c0_101 = arith.constant 0 : index
    %221 = vector.load %arg9[%c0_100, %c0_101] : memref<1x32xf32, #tpu.memory_space<vmem>>, vector<1x32xf32>
    %222 = vector.broadcast %221 : vector<1x32xf32> to vector<4x32xf32>
    %223 = arith.addf %220, %222 : vector<4x32xf32>
    %cst_102 = arith.constant 0.000000e+00 : f32
    %224 = vector.broadcast %cst_102 : f32 to vector<4x32xf32>
    %225 = arith.maximumf %223, %224 : vector<4x32xf32>
    %226 = vector.shape_cast %225 : vector<4x32xf32> to vector<1x4x32xf32>
    %c0_103 = arith.constant 0 : index
    %c0_104 = arith.constant 0 : index
    %c0_105 = arith.constant 0 : index
    %227 = vector.load %arg10[%c0_103, %c0_104, %c0_105] : memref<1x4x32xf32, #tpu.memory_space<vmem>>, vector<1x4x32xf32>
    tpu.vector_store %arg10[%c0_103, %c0_104, %c0_105], %226 {strides = array<i32>} : memref<1x4x32xf32, #tpu.memory_space<vmem>>, vector<1x4x32xf32>,
    return
  }
  func.func @transform_0(%arg0: i32) -> (i32, i32) {
    %c0_i32 = arith.constant 0 : i32
    %c0_i32_0 = arith.constant 0 : i32
    return %arg0, %c0_i32 : i32, i32
  }
  func.func @transform_1(%arg0: i32) -> (i32, i32, i32) {
    %c0_i32 = arith.constant 0 : i32
    %c0_i32_0 = arith.constant 0 : i32
    %c0_i32_1 = arith.constant 0 : i32
    %c0_i32_2 = arith.constant 0 : i32
    return %c0_i32, %c0_i32_0, %c0_i32_1 : i32, i32, i32
  }
  func.func @transform_2(%arg0: i32) -> (i32, i32) {
    %c0_i32 = arith.constant 0 : i32
    %c0_i32_0 = arith.constant 0 : i32
    %c0_i32_1 = arith.constant 0 : i32
    return %c0_i32, %c0_i32_0 : i32, i32
  }
  func.func @transform_3(%arg0: i32) -> (i32, i32) {
    %c0_i32 = arith.constant 0 : i32
    %c0_i32_0 = arith.constant 0 : i32
    %c0_i32_1 = arith.constant 0 : i32
    return %c0_i32, %c0_i32_0 : i32, i32
  }
  func.func @transform_4(%arg0: i32) -> (i32, i32) {
    %c0_i32 = arith.constant 0 : i32
    %c0_i32_0 = arith.constant 0 : i32
    %c0_i32_1 = arith.constant 0 : i32
    return %c0_i32, %c0_i32_0 : i32, i32
  }
  func.func @transform_5(%arg0: i32) -> (i32, i32) {
    %c0_i32 = arith.constant 0 : i32
    %c0_i32_0 = arith.constant 0 : i32
    %c0_i32_1 = arith.constant 0 : i32
    return %c0_i32, %c0_i32_0 : i32, i32
  }
  func.func @transform_6(%arg0: i32) -> (i32, i32) {
    %c0_i32 = arith.constant 0 : i32
    %c0_i32_0 = arith.constant 0 : i32
    %c0_i32_1 = arith.constant 0 : i32
    return %c0_i32, %c0_i32_0 : i32, i32
  }
  func.func @transform_7(%arg0: i32) -> (i32, i32) {
    %c0_i32 = arith.constant 0 : i32
    %c0_i32_0 = arith.constant 0 : i32
    %c0_i32_1 = arith.constant 0 : i32
    return %c0_i32, %c0_i32_0 : i32, i32
  }
  func.func @transform_8(%arg0: i32) -> (i32, i32) {
    %c0_i32 = arith.constant 0 : i32
    %c0_i32_0 = arith.constant 0 : i32
    %c0_i32_1 = arith.constant 0 : i32
    return %c0_i32, %c0_i32_0 : i32, i32
  }
  func.func @transform_9(%arg0: i32) -> (i32, i32, i32) {
    %c0_i32 = arith.constant 0 : i32
    %c0_i32_0 = arith.constant 0 : i32
    %c0_i32_1 = arith.constant 0 : i32
    return %arg0, %c0_i32, %c0_i32_0 : i32, i32, i32
  }
}

</mosaic_0001>

<llo_original>
// kernel: belief_map_cnn.1
$region0: #{belief_map_cnn.1}
  #allocation0 [shape = 'u32[]', space=smem, size = 0x4, offset = 0x4, fixed_abs, tag = 'smem constant byte address 0x4 - core index']
  #allocation1 [shape = 'u32[72,128]{1,0:T(1,128)}', space=vmem, size = 0x9000, scoped, tag = 'internal scratch']
  #allocation2 [shape = 'f32[64,128]{1,0:T(8,128)}', space=vmem, size = 0x8000, scoped, tag = 'scratch operand']
  %s0 = inlined_call_operand.vmem [shape: f32[128,16], index: 0, kind: input, shape index: {}]
  %s1 = inlined_call_operand.hbm [shape: bf16[5,16,256], index: 1, kind: input, shape index: {}]
  %s2 = inlined_call_operand.vmem [shape: f32[1,128], index: 2, kind: input, shape index: {}]
  %s3 = inlined_call_operand.hbm [shape: bf16[384,256], index: 3, kind: input, shape index: {}]
  %s4 = inlined_call_operand.vmem [shape: f32[1,128], index: 4, kind: input, shape index: {}]
  %s5 = inlined_call_operand.hbm [shape: bf16[384,256], index: 5, kind: input, shape index: {}]
  %s6 = inlined_call_operand.vmem [shape: f32[1,128], index: 6, kind: input, shape index: {}]
  %s7 = inlined_call_operand.vmem [shape: bf16[256,32], index: 7, kind: input, shape index: {}]
  %s8 = inlined_call_operand.vmem [shape: f32[1,32], index: 8, kind: input, shape index: {}]
  %s9 = inlined_call_operand.hbm [shape: f32[2,4,32], index: 9, kind: output, shape index: {}]
  %s10 = sld [smem:[#allocation0]]
  $region81: #{belief_map_cnn.1} parent=0
    _
  %s12 = ssub.s32 1, %s10
  %s13 = scalar_select 0, %s12, %s10
  $region1: #{belief_map_cnn.1} parent=0
    #allocation3 [shape = 'u8[40960]{0}', space=vmem, size = 0xa000, scoped, tag = 'input window, operand 1, single buffered']
    #allocation4 [shape = 's32[2]{0}', space=sflag, size = 0x8, scoped, tag = 'scoped memory for belief_map_cnn.1']
    #allocation5 [shape = 's32[2]{0}', space=sflag, size = 0x8, scoped, tag = 'scoped memory for belief_map_cnn.1']
    #allocation6 [shape = 'u8[196608]{0}', space=vmem, size = 0x30000, scoped, tag = 'input window, operand 3, single buffered']
    #allocation7 [shape = 's32[1]{0}', space=sflag, size = 0x4, scoped, tag = 'scoped memory for belief_map_cnn.1']
    #allocation8 [shape = 'u8[196608]{0}', space=vmem, size = 0x30000, scoped, tag = 'input window, operand 5, single buffered']
    #allocation9 [shape = 'u8[4096]{0}', space=vmem, size = 0x1000, scoped, tag = 'output window, operand 0']
    %14 = vsyncpa [#allocation4], 0
    %15 = vsyncpa [#allocation7], 0
    %16 = vsyncpa [#allocation5], 0
    %s17 = scalar_lea.sflag [#allocation5], 1
    %18 = vsyncpa %s17, 0
    loop: start=0, step=1, limit=4
    $region2: #{belief_map_cnn.1} parent=1 // loop_pre_header
      _
    $region3: #{belief_map_cnn.1} parent=1 // loop_header
      %s20 = sphi 0, %s24
      %p21 = scmp.ge.s32.totalorder %s20, 4
      %s30 = sphi 0, %s32
      %s33 = sphi 0, %s30
      %s34 = sphi 0, %s33
      %s50 = sphi 0, %s34
      %s54 = sphi 0, %s54
      %s56 = sphi 0, %s54
      %s57 = sphi 0, %s56
      %s71 = sphi 0, %s57
      %s75 = sphi 0, %s75
      %s77 = sphi 0, %s75
      %s78 = sphi 0, %s77
      %s92 = sphi 0, %s78
      %s96 = sphi 0, %s96
      %s98 = sphi 0, %s96
      %s99 = sphi 0, %s98
      %s113 = sphi 0, %s99
      %s117 = sphi 0, %s117
      %s119 = sphi 0, %s117
      %s120 = sphi 0, %s119
      %s134 = sphi 0, %s120
      %s138 = sphi 0, %s138
      %s140 = sphi 0, %s138
      %s141 = sphi 0, %s140
      %s155 = sphi 0, %s141
      %s159 = sphi 0, %s159
      %s161 = sphi 0, %s159
      %s162 = sphi 0, %s161
      %s176 = sphi 0, %s162
      %s180 = sphi 0, %s180
      %s182 = sphi 0, %s180
      %s183 = sphi 0, %s182
      %s197 = sphi 0, %s183
      %s201 = sphi 0, %s201
      %s203 = sphi 0, %s201
      %s204 = sphi 0, %s203
      %s218 = sphi 0, %s204
      %s224 = sphi 0, %s226
      %s227 = sphi 0, %s224
      %s228 = sphi 0, %s227
      %s244 = sphi 0, %s228
    $region4: #{belief_map_cnn.1} parent=1 // loop_header_branch
      %23 = sbr.rel (%p21) target = $region8
    $region5: #{belief_map_cnn.1} parent=1 // loop_body
      %s25 = ssub.s32 %s20, 1
      %s26 = ssub.s32 %s20, 2
      %s27 = sadd.s32 %s20, 1
      %s28 = ssub.s32 %s20, %s27
      %p29 = scmp.eq.s32.totalorder %s28, 0
      %s31 = sadd.s32 %s30, 1
      %s32 = scalar_select %p29, %s30, %s31
      %p35 = pneg %p29
      %p36 = scmp.eq.s32.totalorder %s20, 1
      %p37 = por %p35, %p36
      %p38 = scmp.ne.s32.totalorder %s30, %s33
      %p39 = scmp.eq.s32.totalorder %s20, 0
      %p40 = por %p38, %p39
      %p41 = scmp.ne.s32.totalorder %s30, %s33
      %p42 = scmp.eq.s32.totalorder %s25, 1
      %p43 = por %p41, %p42
      %p44 = scmp.ne.s32.totalorder %s33, %s34
      %p45 = scmp.eq.s32.totalorder %s25, 0
      %p46 = por %p44, %p45
      %p47 = scmp.ne.s32.totalorder %s33, %s34
      %p48 = scmp.eq.s32.totalorder %s26, 1
      %p49 = por %p47, %p48
      %p51 = scmp.ne.s32.totalorder %s34, %s50
      %p52 = scmp.eq.s32.totalorder %s26, 0
      %p53 = por %p51, %p52
      %s55 = sadd.s32 %s54, 1
      %p58 = scmp.eq.s32.totalorder %s20, 1
      %p59 = scmp.ne.s32.totalorder %s54, %s56
      %p60 = scmp.eq.s32.totalorder %s20, 0
      %p61 = por %p59, %p60
      %p62 = scmp.ne.s32.totalorder %s54, %s56
      %p63 = scmp.eq.s32.totalorder %s25, 1
      %p64 = por %p62, %p63
      %p65 = scmp.ne.s32.totalorder %s56, %s57
      %p66 = scmp.eq.s32.totalorder %s25, 0
      %p67 = por %p65, %p66
      %p68 = scmp.ne.s32.totalorder %s56, %s57
      %p69 = scmp.eq.s32.totalorder %s26, 1
      %p70 = por %p68, %p69
      %p72 = scmp.ne.s32.totalorder %s57, %s71
      %p73 = scmp.eq.s32.totalorder %s26, 0
      %p74 = por %p72, %p73
      %s76 = sadd.s32 %s75, 1
      %p79 = scmp.eq.s32.totalorder %s20, 1
      %p80 = scmp.ne.s32.totalorder %s75, %s77
      %p81 = scmp.eq.s32.totalorder %s20, 0
      %p82 = por %p80, %p81
      %p83 = scmp.ne.s32.totalorder %s75, %s77
      %p84 = scmp.eq.s32.totalorder %s25, 1
      %p85 = por %p83, %p84
      %p86 = scmp.ne.s32.totalorder %s77, %s78
      %p87 = scmp.eq.s32.totalorder %s25, 0
      %p88 = por %p86, %p87
      %p89 = scmp.ne.s32.totalorder %s77, %s78
      %p90 = scmp.eq.s32.totalorder %s26, 1
      %p91 = por %p89, %p90
      %p93 = scmp.ne.s32.totalorder %s78, %s92
      %p94 = scmp.eq.s32.totalorder %s26, 0
      %p95 = por %p93, %p94
      %s97 = sadd.s32 %s96, 1
      %p100 = scmp.eq.s32.totalorder %s20, 1
      %p101 = scmp.ne.s32.totalorder %s96, %s98
      %p102 = scmp.eq.s32.totalorder %s20, 0
      %p103 = por %p101, %p102
      %p104 = scmp.ne.s32.totalorder %s96, %s98
      %p105 = scmp.eq.s32.totalorder %s25, 1
      %p106 = por %p104, %p105
      %p107 = scmp.ne.s32.totalorder %s98, %s99
      %p108 = scmp.eq.s32.totalorder %s25, 0
      %p109 = por %p107, %p108
      %p110 = scmp.ne.s32.totalorder %s98, %s99
      %p111 = scmp.eq.s32.totalorder %s26, 1
      %p112 = por %p110, %p111
      %p114 = scmp.ne.s32.totalorder %s99, %s113
      %p115 = scmp.eq.s32.totalorder %s26, 0
      %p116 = por %p114, %p115
      %s118 = sadd.s32 %s117, 1
      %p121 = scmp.eq.s32.totalorder %s20, 1
      %p122 = scmp.ne.s32.totalorder %s117, %s119
      %p123 = scmp.eq.s32.totalorder %s20, 0
      %p124 = por %p122, %p123
      %p125 = scmp.ne.s32.totalorder %s117, %s119
      %p126 = scmp.eq.s32.totalorder %s25, 1
      %p127 = por %p125, %p126
      %p128 = scmp.ne.s32.totalorder %s119, %s120
      %p129 = scmp.eq.s32.totalorder %s25, 0
      %p130 = por %p128, %p129
      %p131 = scmp.ne.s32.totalorder %s119, %s120
      %p132 = scmp.eq.s32.totalorder %s26, 1
      %p133 = por %p131, %p132
      %p135 = scmp.ne.s32.totalorder %s120, %s134
      %p136 = scmp.eq.s32.totalorder %s26, 0
      %p137 = por %p135, %p136
      %s139 = sadd.s32 %s138, 1
      %p142 = scmp.eq.s32.totalorder %s20, 1
      %p143 = scmp.ne.s32.totalorder %s138, %s140
      %p144 = scmp.eq.s32.totalorder %s20, 0
      %p145 = por %p143, %p144
      %p146 = scmp.ne.s32.totalorder %s138, %s140
      %p147 = scmp.eq.s32.totalorder %s25, 1
      %p148 = por %p146, %p147
      %p149 = scmp.ne.s32.totalorder %s140, %s141
      %p150 = scmp.eq.s32.totalorder %s25, 0
      %p151 = por %p149, %p150
      %p152 = scmp.ne.s32.totalorder %s140, %s141
      %p153 = scmp.eq.s32.totalorder %s26, 1
      %p154 = por %p152, %p153
      %p156 = scmp.ne.s32.totalorder %s141, %s155
      %p157 = scmp.eq.s32.totalorder %s26, 0
      %p158 = por %p156, %p157
      %s160 = sadd.s32 %s159, 1
      %p163 = scmp.eq.s32.totalorder %s20, 1
      %p164 = scmp.ne.s32.totalorder %s159, %s161
      %p165 = scmp.eq.s32.totalorder %s20, 0
      %p166 = por %p164, %p165
      %p167 = scmp.ne.s32.totalorder %s159, %s161
      %p168 = scmp.eq.s32.totalorder %s25, 1
      %p169 = por %p167, %p168
      %p170 = scmp.ne.s32.totalorder %s161, %s162
      %p171 = scmp.eq.s32.totalorder %s25, 0
      %p172 = por %p170, %p171
      %p173 = scmp.ne.s32.totalorder %s161, %s162
      %p174 = scmp.eq.s32.totalorder %s26, 1
      %p175 = por %p173, %p174
      %p177 = scmp.ne.s32.totalorder %s162, %s176
      %p178 = scmp.eq.s32.totalorder %s26, 0
      %p179 = por %p177, %p178
      %s181 = sadd.s32 %s180, 1
      %p184 = scmp.eq.s32.totalorder %s20, 1
      %p185 = scmp.ne.s32.totalorder %s180, %s182
      %p186 = scmp.eq.s32.totalorder %s20, 0
      %p187 = por %p185, %p186
      %p188 = scmp.ne.s32.totalorder %s180, %s182
      %p189 = scmp.eq.s32.totalorder %s25, 1
      %p190 = por %p188, %p189
      %p191 = scmp.ne.s32.totalorder %s182, %s183
      %p192 = scmp.eq.s32.totalorder %s25, 0
      %p193 = por %p191, %p192
      %p194 = scmp.ne.s32.totalorder %s182, %s183
      %p195 = scmp.eq.s32.totalorder %s26, 1
      %p196 = por %p194, %p195
      %p198 = scmp.ne.s32.totalorder %s183, %s197
      %p199 = scmp.eq.s32.totalorder %s26, 0
      %p200 = por %p198, %p199
      %s202 = sadd.s32 %s201, 1
      %p205 = scmp.eq.s32.totalorder %s20, 1
      %p206 = scmp.ne.s32.totalorder %s201, %s203
      %p207 = scmp.eq.s32.totalorder %s20, 0
      %p208 = por %p206, %p207
      %p209 = scmp.ne.s32.totalorder %s201, %s203
      %p210 = scmp.eq.s32.totalorder %s25, 1
      %p211 = por %p209, %p210
      %p212 = scmp.ne.s32.totalorder %s203, %s204
      %p213 = scmp.eq.s32.totalorder %s25, 0
      %p214 = por %p212, %p213
      %p215 = scmp.ne.s32.totalorder %s203, %s204
      %p216 = scmp.eq.s32.totalorder %s26, 1
      %p217 = por %p215, %p216
      %p219 = scmp.ne.s32.totalorder %s204, %s218
      %p220 = scmp.eq.s32.totalorder %s26, 0
      %p221 = por %p219, %p220
      %s222 = ssub.s32 %s20, %s27
      %p223 = scmp.eq.s32.totalorder %s222, 0
      %s225 = sadd.s32 %s224, 1
      %s226 = scalar_select %p223, %s224, %s225
      %p229 = pneg %p223
      %p230 = scmp.eq.s32.totalorder %s20, 1
      %p231 = por %p229, %p230
      %p232 = scmp.ne.s32.totalorder %s224, %s227
      %p233 = scmp.eq.s32.totalorder %s20, 0
      %p234 = por %p232, %p233
      %p235 = scmp.ne.s32.totalorder %s224, %s227
      %p236 = scmp.eq.s32.totalorder %s25, 1
      %p237 = por %p235, %p236
      %p238 = scmp.ne.s32.totalorder %s227, %s228
      %p239 = scmp.eq.s32.totalorder %s25, 0
      %p240 = por %p238, %p239
      %p241 = scmp.ne.s32.totalorder %s227, %s228
      %p242 = scmp.eq.s32.totalorder %s26, 1
      %p243 = por %p241, %p242
      %p245 = scmp.ne.s32.totalorder %s228, %s244
      %p246 = scmp.eq.s32.totalorder %s26, 0
      %p247 = por %p245, %p246
      %p248 = scmp.le.s32.totalorder 1, %s20
      %p249 = scmp.lt.s32.totalorder %s20, 3
      %p250 = pnand %p248, %p249
      %p251 = pneg %p250
      // Predicated region
      $region9: #{belief_map_cnn.1} parent=5 // pred_check
        _
      $region10: #{belief_map_cnn.1} parent=5 // pred_check_branch
        %253 = sbr.rel (%p250) target = $region12
      $region11: #{belief_map_cnn.1} parent=5 // pred_region
        %s254 = ssub.s32 %s20, 1
        // Predicated region
        $region13: #{belief_map_cnn.1} parent=11 // pred_check
          %p255 = pneg %p67
        $region14: #{belief_map_cnn.1} parent=11 // pred_check_branch
          %257 = sbr.rel (%p255) target = $region16
        $region15: #{belief_map_cnn.1} parent=11 // pred_region
          %259 = vsyncadd [#allocation4], 0
          %s260 = sshll.u32 %s1, 4
          %s261 = int_to_ptr.hbm [resolvable:$true] %s260
          %s262 = sshll.u32 [#allocation3], 4
          %s263 = int_to_ptr.vmem [resolvable:$true] %s262
          %268 = dma.hbm_to_vmem [thread:$0]  %s261, 1280, %s263, [#allocation4], 128, 128, 8
        $region16: #{belief_map_cnn.1} parent=11 // pred_fallthru
          _
        // Predicated region
        $region17: #{belief_map_cnn.1} parent=11 // pred_check
          %p269 = pneg %p88
        $region18: #{belief_map_cnn.1} parent=11 // pred_check_branch
          %271 = sbr.rel (%p269) target = $region20
        $region19: #{belief_map_cnn.1} parent=11 // pred_region
          _
        $region20: #{belief_map_cnn.1} parent=11 // pred_fallthru
          _
        // Predicated region
        $region21: #{belief_map_cnn.1} parent=11 // pred_check
          %p272 = pneg %p109
        $region22: #{belief_map_cnn.1} parent=11 // pred_check_branch
          %274 = sbr.rel (%p272) target = $region24
        $region23: #{belief_map_cnn.1} parent=11 // pred_region
          %276 = vsyncadd [#allocation7], 0
          %s277 = sshll.u32 %s3, 4
          %s278 = int_to_ptr.hbm [resolvable:$true] %s277
          %s279 = sshll.u32 [#allocation6], 4
          %s280 = int_to_ptr.vmem [resolvable:$true] %s279
          %285 = dma.hbm_to_vmem [thread:$0]  %s278, 6144, %s280, [#allocation7], 128, 128, 8
        $region24: #{belief_map_cnn.1} parent=11 // pred_fallthru
          _
        // Predicated region
        $region25: #{belief_map_cnn.1} parent=11 // pred_check
          %p286 = pneg %p130
        $region26: #{belief_map_cnn.1} parent=11 // pred_check_branch
          %288 = sbr.rel (%p286) target = $region28
        $region27: #{belief_map_cnn.1} parent=11 // pred_region
          _
        $region28: #{belief_map_cnn.1} parent=11 // pred_fallthru
          _
        // Predicated region
        $region29: #{belief_map_cnn.1} parent=11 // pred_check
          %p289 = pneg %p151
        $region30: #{belief_map_cnn.1} parent=11 // pred_check_branch
          %291 = sbr.rel (%p289) target = $region32
        $region31: #{belief_map_cnn.1} parent=11 // pred_region
          %293 = vsyncadd [#allocation7], 0
          %s294 = sshll.u32 %s5, 4
          %s295 = int_to_ptr.hbm [resolvable:$true] %s294
          %s296 = sshll.u32 [#allocation8], 4
          %s297 = int_to_ptr.vmem [resolvable:$true] %s296
          %302 = dma.hbm_to_vmem [thread:$0]  %s295, 6144, %s297, [#allocation7], 128, 128, 8
        $region32: #{belief_map_cnn.1} parent=11 // pred_fallthru
          _
        // Predicated region
        $region33: #{belief_map_cnn.1} parent=11 // pred_check
          %p303 = pneg %p172
        $region34: #{belief_map_cnn.1} parent=11 // pred_check_branch
          %305 = sbr.rel (%p303) target = $region36
        $region35: #{belief_map_cnn.1} parent=11 // pred_region
          _
        $region36: #{belief_map_cnn.1} parent=11 // pred_fallthru
          _
        // Predicated region
        $region37: #{belief_map_cnn.1} parent=11 // pred_check
          %p306 = pneg %p193
        $region38: #{belief_map_cnn.1} parent=11 // pred_check_branch
          %308 = sbr.rel (%p306) target = $region40
        $region39: #{belief_map_cnn.1} parent=11 // pred_region
          _
        $region40: #{belief_map_cnn.1} parent=11 // pred_fallthru
          _
        // Predicated region
        $region41: #{belief_map_cnn.1} parent=11 // pred_check
          %p309 = pneg %p214
        $region42: #{belief_map_cnn.1} parent=11 // pred_check_branch
          %311 = sbr.rel (%p309) target = $region44
        $region43: #{belief_map_cnn.1} parent=11 // pred_region
          _
        $region44: #{belief_map_cnn.1} parent=11 // pred_fallthru
          _
      $region12: #{belief_map_cnn.1} parent=5 // pred_fallthru
        _
      %p312 = scmp.lt.s32.totalorder %s20, 2
      // Predicated region
      $region45: #{belief_map_cnn.1} parent=5 // pred_check
        %p313 = pneg %p312
      $region46: #{belief_map_cnn.1} parent=5 // pred_check_branch
        %315 = sbr.rel (%p313) target = $region48
      $region47: #{belief_map_cnn.1} parent=5 // pred_region
        // Predicated region
        $region49: #{belief_map_cnn.1} parent=47 // pred_check
          %p316 = pneg %p40
        $region50: #{belief_map_cnn.1} parent=47 // pred_check_branch
          %318 = sbr.rel (%p316) target = $region52
        $region51: #{belief_map_cnn.1} parent=47 // pred_region
          %s319 = smul.u32 8, %s20
          %p320 = scmp.lt.s32.totalorder %s319, 15
          %s321 = scalar_select %p320, %s319, 15
          %s322 = smul.addr %s321, 8
          %s323 = scalar_lea.vmem %s0, %s322
          %s324 = smul.u32 8, %s20
        $region52: #{belief_map_cnn.1} parent=47 // pred_fallthru
          _
      $region48: #{belief_map_cnn.1} parent=5 // pred_fallthru
        _
      %p325 = scmp.le.s32.totalorder 1, %s20
      %p326 = scmp.lt.s32.totalorder %s20, 3
      %p327 = pnand %p325, %p326
      %p328 = pneg %p327
      // Predicated region
      $region53: #{belief_map_cnn.1} parent=5 // pred_check
        _
      $region54: #{belief_map_cnn.1} parent=5 // pred_check_branch
        %330 = sbr.rel (%p327) target = $region56
      $region55: #{belief_map_cnn.1} parent=5 // pred_region
        %s331 = ssub.s32 %s20, 1
        // Predicated region
        $region57: #{belief_map_cnn.1} parent=55 // pred_check
          %p332 = pneg %p67
        $region58: #{belief_map_cnn.1} parent=55 // pred_check_branch
          %334 = sbr.rel (%p332) target = $region60
        $region59: #{belief_map_cnn.1} parent=55 // pred_region
          %336 = dma.done [#allocation4], 1280
        $region60: #{belief_map_cnn.1} parent=55 // pred_fallthru
          _
        // Predicated region
        $region61: #{belief_map_cnn.1} parent=55 // pred_check
          %p337 = pneg %p109
        $region62: #{belief_map_cnn.1} parent=55 // pred_check_branch
          %339 = sbr.rel (%p337) target = $region64
        $region63: #{belief_map_cnn.1} parent=55 // pred_region
          %341 = dma.done [#allocation7], 6144
        $region64: #{belief_map_cnn.1} parent=55 // pred_fallthru
          _
        // Predicated region
        $region65: #{belief_map_cnn.1} parent=55 // pred_check
          %p342 = pneg %p151
        $region66: #{belief_map_cnn.1} parent=55 // pred_check_branch
          %344 = sbr.rel (%p342) target = $region68
        $region67: #{belief_map_cnn.1} parent=55 // pred_region
          %346 = dma.done [#allocation7], 6144
        $region68: #{belief_map_cnn.1} parent=55 // pred_fallthru
          _
        %s347 = smul.u32 8, %s25
        %p348 = scmp.lt.s32.totalorder %s347, 15
        %s349 = scalar_select %p348, %s347, 15
        %s350 = smul.addr %s349, 8
        %s351 = scalar_lea.vmem %s0, %s350
        %p352 = pneg %p46
        %p353 = pneg %p43
        %p354 = pneg %p67
        %p355 = pneg %p64
        %p356 = pneg %p88
        %p357 = pneg %p85
        %p358 = pneg %p109
        %p359 = pneg %p106
        %p360 = pneg %p130
        %p361 = pneg %p127
        %p362 = pneg %p151
        %p363 = pneg %p148
        %p364 = pneg %p172
        %p365 = pneg %p169
        %p366 = pneg %p193
        %p367 = pneg %p190
        %p368 = pneg %p214
        %p369 = pneg %p211
        %p370 = pneg %p240
        %p371 = pneg %p237
        %s372 = sand.u32 %s227, 1
        %s373 = scalar_lea.sflag [#allocation5], %s372
        %s374 = sand.u32 %s227, 1
        %s375 = smul.addr %s374, 4
        %s376 = scalar_lea.vmem [#allocation9], %s375
        %s377 = smul.u32 8, %s25
        %p378 = scmp.lt.s32.totalorder %s377, 15
        %s379 = scalar_select %p378, %s377, 15
        %s380 = smul.addr %s379, 8
        %s381 = scalar_lea.vmem %s0, %s380
        %s382 = smul.u32 8, %s25
        %v384 = vld [vmem:[%s381] sm:$0xff]
        %v385 = vld [vmem:[%s381 + $0x8] sm:$0xff]
        %v386 = vld [vmem:[%s381 + $0x10] sm:$0xff]
        %v387 = vld [vmem:[%s381 + $0x18] sm:$0xff]
        %v388 = vld [vmem:[%s381 + $0x20] sm:$0xff]
        %v389 = vld [vmem:[%s381 + $0x28] sm:$0xff]
        %v390 = vld [vmem:[%s381 + $0x30] sm:$0xff]
        %v391 = vld [vmem:[%s381 + $0x38] sm:$0xff]
        %v392 = vadd.f32 %v384, 1.0
        %v393 = vadd.f32 %v385, 1.0
        %v394 = vadd.f32 %v386, 1.0
        %v395 = vadd.f32 %v387, 1.0
        %v396 = vadd.f32 %v388, 1.0
        %v397 = vadd.f32 %v389, 1.0
        %v398 = vadd.f32 %v390, 1.0
        %v399 = vadd.f32 %v391, 1.0
        %v400 = vmul.f32 %v392, 0.5
        %v401 = vmul.f32 %v393, 0.5
        %v402 = vmul.f32 %v394, 0.5
        %v403 = vmul.f32 %v395, 0.5
        %v404 = vmul.f32 %v396, 0.5
        %v405 = vmul.f32 %v397, 0.5
        %v406 = vmul.f32 %v398, 0.5
        %v407 = vmul.f32 %v399, 0.5
        %v408 = vlaneseq
        %v409 = vshrl.u32 %v408, 7
        %v410 = vadd.s32 %v409, 8
        %v411 = vadd.s32 %v409, 16
        %v412 = vadd.s32 %v409, 24
        %v413 = vadd.s32 %v409, 32
        %v414 = vadd.s32 %v409, 40
        %v415 = vadd.s32 %v409, 48
        %v416 = vadd.s32 %v409, 56
        %v417 = vand.u32 %v409, 15
        %v418 = vand.u32 %v410, 15
        %v419 = vand.u32 %v411, 15
        %v420 = vand.u32 %v412, 15
        %v421 = vand.u32 %v413, 15
        %v422 = vand.u32 %v414, 15
        %v423 = vand.u32 %v415, 15
        %v424 = vand.u32 %v416, 15
        %vm433 = vcmask 1041408
        %v434 = vrot.slane %v400, 6
        %v435 = vrot.slane %v401, 6
        %v436 = vsel %vm433, %v434, %v435
        %v437 = vrot.slane %v402, 6
        %v438 = vsel %vm433, %v435, %v437
        %v439 = vrot.slane %v403, 6
        %v440 = vsel %vm433, %v437, %v439
        %v441 = vrot.slane %v404, 6
        %v442 = vsel %vm433, %v439, %v441
        %v443 = vrot.slane %v405, 6
        %v444 = vsel %vm433, %v441, %v443
        %v445 = vrot.slane %v406, 6
        %v446 = vsel %vm433, %v443, %v445
        %v447 = vrot.slane %v407, 6
        %v448 = vsel %vm433, %v445, %v447
        %v457 = vsel %vm433, 0.0, %v434
        %v458 = vadd.s32 %v417, 4294967294
        %v459 = vadd.s32 %v418, 4294967294
        %v460 = vadd.s32 %v419, 4294967294
        %v461 = vadd.s32 %v420, 4294967294
        %v462 = vadd.s32 %v421, 4294967294
        %v463 = vadd.s32 %v422, 4294967294
        %v464 = vadd.s32 %v423, 4294967294
        %v465 = vadd.s32 %v424, 4294967294
        %vm466 = vcmp.ge.s32.totalorder %v458, 0
        %vm467 = vcmp.ge.s32.totalorder %v459, 0
        %vm468 = vcmp.ge.s32.totalorder %v460, 0
        %vm469 = vcmp.ge.s32.totalorder %v461, 0
        %vm470 = vcmp.ge.s32.totalorder %v462, 0
        %vm471 = vcmp.ge.s32.totalorder %v463, 0
        %vm472 = vcmp.ge.s32.totalorder %v464, 0
        %vm473 = vcmp.ge.s32.totalorder %v465, 0
        %vm474 = vcmp.lt.s32.totalorder %v458, 16
        %vm475 = vcmp.lt.s32.totalorder %v459, 16
        %vm476 = vcmp.lt.s32.totalorder %v460, 16
        %vm477 = vcmp.lt.s32.totalorder %v461, 16
        %vm478 = vcmp.lt.s32.totalorder %v462, 16
        %vm479 = vcmp.lt.s32.totalorder %v463, 16
        %vm480 = vcmp.lt.s32.totalorder %v464, 16
        %vm481 = vcmp.lt.s32.totalorder %v465, 16
        %vm482 = vmand %vm466, %vm474
        %vm483 = vmand %vm467, %vm475
        %vm484 = vmand %vm468, %vm476
        %vm485 = vmand %vm469, %vm477
        %vm486 = vmand %vm470, %vm478
        %vm487 = vmand %vm471, %vm479
        %vm488 = vmand %vm472, %vm480
        %vm489 = vmand %vm473, %vm481
        %v490 = vsel %vm482, 1, 0
        %v491 = vsel %vm483, 1, 0
        %v492 = vsel %vm484, 1, 0
        %v493 = vsel %vm485, 1, 0
        %v494 = vsel %vm486, 1, 0
        %v495 = vsel %vm487, 1, 0
        %v496 = vsel %vm488, 1, 0
        %v497 = vsel %vm489, 1, 0
        %vm498 = vcmp.eq.s32.totalorder %v490, 1
        %vm499 = vcmp.eq.s32.totalorder %v491, 1
        %vm500 = vcmp.eq.s32.totalorder %v492, 1
        %vm501 = vcmp.eq.s32.totalorder %v493, 1
        %vm502 = vcmp.eq.s32.totalorder %v494, 1
        %vm503 = vcmp.eq.s32.totalorder %v495, 1
        %vm504 = vcmp.eq.s32.totalorder %v496, 1
        %vm505 = vcmp.eq.s32.totalorder %v497, 1
        %v506 = vsel %vm498, %v457, 0.0
        %v507 = vsel %vm499, %v436, 0.0
        %v508 = vsel %vm500, %v438, 0.0
        %v509 = vsel %vm501, %v440, 0.0
        %v510 = vsel %vm502, %v442, 0.0
        %v511 = vsel %vm503, %v444, 0.0
        %v512 = vsel %vm504, %v446, 0.0
        %v513 = vsel %vm505, %v448, 0.0
        %v514 = vpack.c.bf16 %v507, %v506
        %v515 = vpack.c.bf16 %v509, %v508
        %v516 = vpack.c.bf16 %v511, %v510
        %v517 = vpack.c.bf16 %v513, %v512
        %v518 = vld [vmem:[#allocation3] sm:$0xff]
        %v519 = vld [vmem:[#allocation3 + $0x8] sm:$0xff]
        %vm520 = vcmask 1040384
        %v521 = vrot.slane %v400, 7
        %v522 = vrot.slane %v401, 7
        %v523 = vsel %vm520, %v521, %v522
        %v524 = vrot.slane %v402, 7
        %v525 = vsel %vm520, %v522, %v524
        %v526 = vrot.slane %v403, 7
        %v527 = vsel %vm520, %v524, %v526
        %v528 = vrot.slane %v404, 7
        %v529 = vsel %vm520, %v526, %v528
        %v530 = vrot.slane %v405, 7
        %v531 = vsel %vm520, %v528, %v530
        %v532 = vrot.slane %v406, 7
        %v533 = vsel %vm520, %v530, %v532
        %v534 = vrot.slane %v407, 7
        %v535 = vsel %vm520, %v532, %v534
        %v544 = vsel %vm520, 0.0, %v521
        %v545 = vadd.s32 %v417, 4294967295
        %v546 = vadd.s32 %v418, 4294967295
        %v547 = vadd.s32 %v419, 4294967295
        %v548 = vadd.s32 %v420, 4294967295
        %v549 = vadd.s32 %v421, 4294967295
        %v550 = vadd.s32 %v422, 4294967295
        %v551 = vadd.s32 %v423, 4294967295
        %v552 = vadd.s32 %v424, 4294967295
        %vm553 = vcmp.ge.s32.totalorder %v545, 0
        %vm554 = vcmp.ge.s32.totalorder %v546, 0
        %vm555 = vcmp.ge.s32.totalorder %v547, 0
        %vm556 = vcmp.ge.s32.totalorder %v548, 0
        %vm557 = vcmp.ge.s32.totalorder %v549, 0
        %vm558 = vcmp.ge.s32.totalorder %v550, 0
        %vm559 = vcmp.ge.s32.totalorder %v551, 0
        %vm560 = vcmp.ge.s32.totalorder %v552, 0
        %vm561 = vcmp.lt.s32.totalorder %v545, 16
        %vm562 = vcmp.lt.s32.totalorder %v546, 16
        %vm563 = vcmp.lt.s32.totalorder %v547, 16
        %vm564 = vcmp.lt.s32.totalorder %v548, 16
        %vm565 = vcmp.lt.s32.totalorder %v549, 16
        %vm566 = vcmp.lt.s32.totalorder %v550, 16
        %vm567 = vcmp.lt.s32.totalorder %v551, 16
        %vm568 = vcmp.lt.s32.totalorder %v552, 16
        %vm569 = vmand %vm553, %vm561
        %vm570 = vmand %vm554, %vm562
        %vm571 = vmand %vm555, %vm563
        %vm572 = vmand %vm556, %vm564
        %vm573 = vmand %vm557, %vm565
        %vm574 = vmand %vm558, %vm566
        %vm575 = vmand %vm559, %vm567
        %vm576 = vmand %vm560, %vm568
        %v577 = vsel %vm569, 1, 0
        %v578 = vsel %vm570, 1, 0
        %v579 = vsel %vm571, 1, 0
        %v580 = vsel %vm572, 1, 0
        %v581 = vsel %vm573, 1, 0
        %v582 = vsel %vm574, 1, 0
        %v583 = vsel %vm575, 1, 0
        %v584 = vsel %vm576, 1, 0
        %vm585 = vcmp.eq.s32.totalorder %v577, 1
        %vm586 = vcmp.eq.s32.totalorder %v578, 1
        %vm587 = vcmp.eq.s32.totalorder %v579, 1
        %vm588 = vcmp.eq.s32.totalorder %v580, 1
        %vm589 = vcmp.eq.s32.totalorder %v581, 1
        %vm590 = vcmp.eq.s32.totalorder %v582, 1
        %vm591 = vcmp.eq.s32.totalorder %v583, 1
        %vm592 = vcmp.eq.s32.totalorder %v584, 1
        %v593 = vsel %vm585, %v544, 0.0
        %v594 = vsel %vm586, %v523, 0.0
        %v595 = vsel %vm587, %v525, 0.0
        %v596 = vsel %vm588, %v527, 0.0
        %v597 = vsel %vm589, %v529, 0.0
        %v598 = vsel %vm590, %v531, 0.0
        %v599 = vsel %vm591, %v533, 0.0
        %v600 = vsel %vm592, %v535, 0.0
        %v601 = vpack.c.bf16 %v594, %v593
        %v602 = vpack.c.bf16 %v596, %v595
        %v603 = vpack.c.bf16 %v598, %v597
        %v604 = vpack.c.bf16 %v600, %v599
        %s605 = scalar_lea.vmem [#allocation3], 16
        %v606 = vld [vmem:[%s605] sm:$0xff]
        %v607 = vld [vmem:[%s605 + $0x8] sm:$0xff]
        %v610 = vunpack.c.l.b16 %v606
        %v611 = vunpack.c.h.b16 %v606
        %v612 = vunpack.c.l.b16 %v607
        %v613 = vunpack.c.h.b16 %v607
        %v614 = vpack.c.b16 %v612, %v610
        %v615 = vpack.c.b16 %v613, %v611
        %vm618 = vcmask 130048
        %v620 = vsel %vm618, %v601, 0
        %v623 = vsel %vm618, %v602, 0
        %v626 = vsel %vm618, %v603, 0
        %v629 = vsel %vm618, %v604, 0
        %631 = vmatpush.bf16.msra.mxu0 0
        %632 = vmatpush.bf16.msra.mxu0 0
        %633 = vmatpush.bf16.msra.mxu0 0
        %634 = vmatpush.bf16.msra.mxu0 0
        %635 = vmatpush.bf16.msra.mxu0 0
        %636 = vmatpush.bf16.msra.mxu0 0
        %637 = vmatpush.bf16.msra.mxu0 0
        %638 = vmatpush.bf16.msra.mxu0 %v614
        %639 = vmatmul.bf16.gmra.mxu0 %v620
        %v640 = vpop.f32.mrf.mxu0
        %v641 = vadd.f32 0.0, %v640
        %v642 = vpop.f32.mrf.mxu0
        %v643 = vadd.f32 0.0, %v642
        %644 = vmatmul.bf16.gmra.mxu0 %v623
        %v645 = vpop.f32.mrf.mxu0
        %v646 = vadd.f32 0.0, %v645
        %v647 = vpop.f32.mrf.mxu0
        %v648 = vadd.f32 0.0, %v647
        %649 = vmatmul.bf16.gmra.mxu0 %v626
        %v650 = vpop.f32.mrf.mxu0
        %v651 = vadd.f32 0.0, %v650
        %v652 = vpop.f32.mrf.mxu0
        %v653 = vadd.f32 0.0, %v652
        %654 = vmatmul.bf16.gmra.mxu0 %v629
        %v655 = vpop.f32.mrf.mxu0
        %v656 = vadd.f32 0.0, %v655
        %v657 = vpop.f32.mrf.mxu0
        %v658 = vadd.f32 0.0, %v657
        %659 = vdwg.mxu0
        %660 = vmatpush.bf16.msra.mxu0 0
        %661 = vmatpush.bf16.msra.mxu0 0
        %662 = vmatpush.bf16.msra.mxu0 0
        %663 = vmatpush.bf16.msra.mxu0 0
        %664 = vmatpush.bf16.msra.mxu0 0
        %665 = vmatpush.bf16.msra.mxu0 0
        %666 = vmatpush.bf16.msra.mxu0 0
        %667 = vmatpush.bf16.msra.mxu0 %v615
        %668 = vmatmul.bf16.gmra.mxu0 %v620
        %v669 = vpop.f32.mrf.mxu0
        %v670 = vadd.f32 0.0, %v669
        %v671 = vpop.f32.mrf.mxu0
        %v672 = vadd.f32 0.0, %v671
        %673 = vmatmul.bf16.gmra.mxu0 %v623
        %v674 = vpop.f32.mrf.mxu0
        %v675 = vadd.f32 0.0, %v674
        %v676 = vpop.f32.mrf.mxu0
        %v677 = vadd.f32 0.0, %v676
        %678 = vmatmul.bf16.gmra.mxu0 %v626
        %v679 = vpop.f32.mrf.mxu0
        %v680 = vadd.f32 0.0, %v679
        %v681 = vpop.f32.mrf.mxu0
        %v682 = vadd.f32 0.0, %v681
        %683 = vmatmul.bf16.gmra.mxu0 %v629
        %v684 = vpop.f32.mrf.mxu0
        %v685 = vadd.f32 0.0, %v684
        %v686 = vpop.f32.mrf.mxu0
        %v687 = vadd.f32 0.0, %v686
        %688 = vdwg.mxu0
        %v691 = vunpack.c.l.b16 %v518
        %v692 = vunpack.c.h.b16 %v518
        %v693 = vunpack.c.l.b16 %v519
        %v694 = vunpack.c.h.b16 %v519
        %v695 = vpack.c.b16 %v693, %v691
        %v696 = vpack.c.b16 %v694, %v692
        %v700 = vsel %vm618, %v514, 0
        %v703 = vsel %vm618, %v515, 0
        %v706 = vsel %vm618, %v516, 0
        %v709 = vsel %vm618, %v517, 0
        %711 = vmatpush.bf16.msra.mxu0 0
        %712 = vmatpush.bf16.msra.mxu0 0
        %713 = vmatpush.bf16.msra.mxu0 0
        %714 = vmatpush.bf16.msra.mxu0 0
        %715 = vmatpush.bf16.msra.mxu0 0
        %716 = vmatpush.bf16.msra.mxu0 0
        %717 = vmatpush.bf16.msra.mxu0 0
        %718 = vmatpush.bf16.msra.mxu0 %v695
        %719 = vmatmul.bf16.gmra.mxu0 %v700
        %v720 = vpop.f32.mrf.mxu0
        %v721 = vadd.f32 %v641, %v720
        %v722 = vpop.f32.mrf.mxu0
        %v723 = vadd.f32 %v643, %v722
        %724 = vmatmul.bf16.gmra.mxu0 %v703
        %v725 = vpop.f32.mrf.mxu0
        %v726 = vadd.f32 %v646, %v725
        %v727 = vpop.f32.mrf.mxu0
        %v728 = vadd.f32 %v648, %v727
        %729 = vmatmul.bf16.gmra.mxu0 %v706
        %v730 = vpop.f32.mrf.mxu0
        %v731 = vadd.f32 %v651, %v730
        %v732 = vpop.f32.mrf.mxu0
        %v733 = vadd.f32 %v653, %v732
        %734 = vmatmul.bf16.gmra.mxu0 %v709
        %v735 = vpop.f32.mrf.mxu0
        %v736 = vadd.f32 %v656, %v735
        %v737 = vpop.f32.mrf.mxu0
        %v738 = vadd.f32 %v658, %v737
        %739 = vdwg.mxu0
        %740 = vmatpush.bf16.msra.mxu0 0
        %741 = vmatpush.bf16.msra.mxu0 0
        %742 = vmatpush.bf16.msra.mxu0 0
        %743 = vmatpush.bf16.msra.mxu0 0
        %744 = vmatpush.bf16.msra.mxu0 0
        %745 = vmatpush.bf16.msra.mxu0 0
        %746 = vmatpush.bf16.msra.mxu0 0
        %747 = vmatpush.bf16.msra.mxu0 %v696
        %748 = vmatmul.bf16.gmra.mxu0 %v700
        %v749 = vpop.f32.mrf.mxu0
        %v750 = vadd.f32 %v670, %v749
        %v751 = vpop.f32.mrf.mxu0
        %v752 = vadd.f32 %v672, %v751
        %753 = vmatmul.bf16.gmra.mxu0 %v703
        %v754 = vpop.f32.mrf.mxu0
        %v755 = vadd.f32 %v675, %v754
        %v756 = vpop.f32.mrf.mxu0
        %v757 = vadd.f32 %v677, %v756
        %758 = vmatmul.bf16.gmra.mxu0 %v706
        %v759 = vpop.f32.mrf.mxu0
        %v760 = vadd.f32 %v680, %v759
        %v761 = vpop.f32.mrf.mxu0
        %v762 = vadd.f32 %v682, %v761
        %763 = vmatmul.bf16.gmra.mxu0 %v709
        %v764 = vpop.f32.mrf.mxu0
        %v765 = vadd.f32 %v685, %v764
        %v766 = vpop.f32.mrf.mxu0
        %v767 = vadd.f32 %v687, %v766
        %768 = vdwg.mxu0
        %v769 = vpack.c.bf16 %v401, %v400
        %v770 = vpack.c.bf16 %v403, %v402
        %v771 = vpack.c.bf16 %v405, %v404
        %v772 = vpack.c.bf16 %v407, %v406
        %s773 = scalar_lea.vmem [#allocation3], 32
        %v774 = vld [vmem:[%s773] sm:$0xff]
        %v775 = vld [vmem:[%s773 + $0x8] sm:$0xff]
        %v778 = vunpack.c.l.b16 %v774
        %v779 = vunpack.c.h.b16 %v774
        %v780 = vunpack.c.l.b16 %v775
        %v781 = vunpack.c.h.b16 %v775
        %v782 = vpack.c.b16 %v780, %v778
        %v783 = vpack.c.b16 %v781, %v779
        %v787 = vsel %vm618, %v769, 0
        %v790 = vsel %vm618, %v770, 0
        %v793 = vsel %vm618, %v771, 0
        %v796 = vsel %vm618, %v772, 0
        %798 = vmatpush.bf16.msra.mxu0 0
        %799 = vmatpush.bf16.msra.mxu0 0
        %800 = vmatpush.bf16.msra.mxu0 0
        %801 = vmatpush.bf16.msra.mxu0 0
        %802 = vmatpush.bf16.msra.mxu0 0
        %803 = vmatpush.bf16.msra.mxu0 0
        %804 = vmatpush.bf16.msra.mxu0 0
        %805 = vmatpush.bf16.msra.mxu0 %v782
        %806 = vmatmul.bf16.gmra.mxu0 %v787
        %v807 = vpop.f32.mrf.mxu0
        %v808 = vadd.f32 0.0, %v807
        %v809 = vpop.f32.mrf.mxu0
        %v810 = vadd.f32 0.0, %v809
        %811 = vmatmul.bf16.gmra.mxu0 %v790
        %v812 = vpop.f32.mrf.mxu0
        %v813 = vadd.f32 0.0, %v812
        %v814 = vpop.f32.mrf.mxu0
        %v815 = vadd.f32 0.0, %v814
        %816 = vmatmul.bf16.gmra.mxu0 %v793
        %v817 = vpop.f32.mrf.mxu0
        %v818 = vadd.f32 0.0, %v817
        %v819 = vpop.f32.mrf.mxu0
        %v820 = vadd.f32 0.0, %v819
        %821 = vmatmul.bf16.gmra.mxu0 %v796
        %v822 = vpop.f32.mrf.mxu0
        %v823 = vadd.f32 0.0, %v822
        %v824 = vpop.f32.mrf.mxu0
        %v825 = vadd.f32 0.0, %v824
        %826 = vdwg.mxu0
        %827 = vmatpush.bf16.msra.mxu0 0
        %828 = vmatpush.bf16.msra.mxu0 0
        %829 = vmatpush.bf16.msra.mxu0 0
        %830 = vmatpush.bf16.msra.mxu0 0
        %831 = vmatpush.bf16.msra.mxu0 0
        %832 = vmatpush.bf16.msra.mxu0 0
        %833 = vmatpush.bf16.msra.mxu0 0
        %834 = vmatpush.bf16.msra.mxu0 %v783
        %835 = vmatmul.bf16.gmra.mxu0 %v787
        %v836 = vpop.f32.mrf.mxu0
        %v837 = vadd.f32 0.0, %v836
        %v838 = vpop.f32.mrf.mxu0
        %v839 = vadd.f32 0.0, %v838
        %840 = vmatmul.bf16.gmra.mxu0 %v790
        %v841 = vpop.f32.mrf.mxu0
        %v842 = vadd.f32 0.0, %v841
        %v843 = vpop.f32.mrf.mxu0
        %v844 = vadd.f32 0.0, %v843
        %845 = vmatmul.bf16.gmra.mxu0 %v793
        %v846 = vpop.f32.mrf.mxu0
        %v847 = vadd.f32 0.0, %v846
        %v848 = vpop.f32.mrf.mxu0
        %v849 = vadd.f32 0.0, %v848
        %850 = vmatmul.bf16.gmra.mxu0 %v796
        %v851 = vpop.f32.mrf.mxu0
        %v852 = vadd.f32 0.0, %v851
        %v853 = vpop.f32.mrf.mxu0
        %v854 = vadd.f32 0.0, %v853
        %855 = vdwg.mxu0
        %v856 = vadd.f32 %v721, %v808
        %v857 = vadd.f32 %v750, %v837
        %v858 = vadd.f32 %v723, %v810
        %v859 = vadd.f32 %v752, %v839
        %v860 = vadd.f32 %v726, %v813
        %v861 = vadd.f32 %v755, %v842
        %v862 = vadd.f32 %v728, %v815
        %v863 = vadd.f32 %v757, %v844
        %v864 = vadd.f32 %v731, %v818
        %v865 = vadd.f32 %v760, %v847
        %v866 = vadd.f32 %v733, %v820
        %v867 = vadd.f32 %v762, %v849
        %v868 = vadd.f32 %v736, %v823
        %v869 = vadd.f32 %v765, %v852
        %v870 = vadd.f32 %v738, %v825
        %v871 = vadd.f32 %v767, %v854
        %vm872 = vcmask 1046528
        %v873 = vrot.slane %v400, 1
        %v874 = vrot.slane %v401, 1
        %v875 = vsel %vm872, %v873, %v874
        %v876 = vrot.slane %v402, 1
        %v877 = vsel %vm872, %v874, %v876
        %v878 = vrot.slane %v403, 1
        %v879 = vsel %vm872, %v876, %v878
        %v880 = vrot.slane %v404, 1
        %v881 = vsel %vm872, %v878, %v880
        %v882 = vrot.slane %v405, 1
        %v883 = vsel %vm872, %v880, %v882
        %v884 = vrot.slane %v406, 1
        %v885 = vsel %vm872, %v882, %v884
        %v886 = vrot.slane %v407, 1
        %v887 = vsel %vm872, %v884, %v886
        %v896 = vsel %vm872, %v886, 0.0
        %v897 = vadd.s32 %v417, 1
        %v898 = vadd.s32 %v418, 1
        %v899 = vadd.s32 %v419, 1
        %v900 = vadd.s32 %v420, 1
        %v901 = vadd.s32 %v421, 1
        %v902 = vadd.s32 %v422, 1
        %v903 = vadd.s32 %v423, 1
        %v904 = vadd.s32 %v424, 1
        %vm905 = vcmp.ge.s32.totalorder %v897, 0
        %vm906 = vcmp.ge.s32.totalorder %v898, 0
        %vm907 = vcmp.ge.s32.totalorder %v899, 0
        %vm908 = vcmp.ge.s32.totalorder %v900, 0
        %vm909 = vcmp.ge.s32.totalorder %v901, 0
        %vm910 = vcmp.ge.s32.totalorder %v902, 0
        %vm911 = vcmp.ge.s32.totalorder %v903, 0
        %vm912 = vcmp.ge.s32.totalorder %v904, 0
        %vm913 = vcmp.lt.s32.totalorder %v897, 16
        %vm914 = vcmp.lt.s32.totalorder %v898, 16
        %vm915 = vcmp.lt.s32.totalorder %v899, 16
        %vm916 = vcmp.lt.s32.totalorder %v900, 16
        %vm917 = vcmp.lt.s32.totalorder %v901, 16
        %vm918 = vcmp.lt.s32.totalorder %v902, 16
        %vm919 = vcmp.lt.s32.totalorder %v903, 16
        %vm920 = vcmp.lt.s32.totalorder %v904, 16
        %vm921 = vmand %vm905, %vm913
        %vm922 = vmand %vm906, %vm914
        %vm923 = vmand %vm907, %vm915
        %vm924 = vmand %vm908, %vm916
        %vm925 = vmand %vm909, %vm917
        %vm926 = vmand %vm910, %vm918
        %vm927 = vmand %vm911, %vm919
        %vm928 = vmand %vm912, %vm920
        %v929 = vsel %vm921, 1, 0
        %v930 = vsel %vm922, 1, 0
        %v931 = vsel %vm923, 1, 0
        %v932 = vsel %vm924, 1, 0
        %v933 = vsel %vm925, 1, 0
        %v934 = vsel %vm926, 1, 0
        %v935 = vsel %vm927, 1, 0
        %v936 = vsel %vm928, 1, 0
        %vm937 = vcmp.eq.s32.totalorder %v929, 1
        %vm938 = vcmp.eq.s32.totalorder %v930, 1
        %vm939 = vcmp.eq.s32.totalorder %v931, 1
        %vm940 = vcmp.eq.s32.totalorder %v932, 1
        %vm941 = vcmp.eq.s32.totalorder %v933, 1
        %vm942 = vcmp.eq.s32.totalorder %v934, 1
        %vm943 = vcmp.eq.s32.totalorder %v935, 1
        %vm944 = vcmp.eq.s32.totalorder %v936, 1
        %v945 = vsel %vm937, %v875, 0.0
        %v946 = vsel %vm938, %v877, 0.0
        %v947 = vsel %vm939, %v879, 0.0
        %v948 = vsel %vm940, %v881, 0.0
        %v949 = vsel %vm941, %v883, 0.0
        %v950 = vsel %vm942, %v885, 0.0
        %v951 = vsel %vm943, %v887, 0.0
        %v952 = vsel %vm944, %v896, 0.0
        %v953 = vpack.c.bf16 %v946, %v945
        %v954 = vpack.c.bf16 %v948, %v947
        %v955 = vpack.c.bf16 %v950, %v949
        %v956 = vpack.c.bf16 %v952, %v951
        %s957 = scalar_lea.vmem [#allocation3], 48
        %v958 = vld [vmem:[%s957] sm:$0xff]
        %v959 = vld [vmem:[%s957 + $0x8] sm:$0xff]
        %v962 = vunpack.c.l.b16 %v958
        %v963 = vunpack.c.h.b16 %v958
        %v964 = vunpack.c.l.b16 %v959
        %v965 = vunpack.c.h.b16 %v959
        %v966 = vpack.c.b16 %v964, %v962
        %v967 = vpack.c.b16 %v965, %v963
        %v971 = vsel %vm618, %v953, 0
        %v974 = vsel %vm618, %v954, 0
        %v977 = vsel %vm618, %v955, 0
        %v980 = vsel %vm618, %v956, 0
        %982 = vmatpush.bf16.msra.mxu0 0
        %983 = vmatpush.bf16.msra.mxu0 0
        %984 = vmatpush.bf16.msra.mxu0 0
        %985 = vmatpush.bf16.msra.mxu0 0
        %986 = vmatpush.bf16.msra.mxu0 0
        %987 = vmatpush.bf16.msra.mxu0 0
        %988 = vmatpush.bf16.msra.mxu0 0
        %989 = vmatpush.bf16.msra.mxu0 %v966
        %990 = vmatmul.bf16.gmra.mxu0 %v971
        %v991 = vpop.f32.mrf.mxu0
        %v992 = vadd.f32 0.0, %v991
        %v993 = vpop.f32.mrf.mxu0
        %v994 = vadd.f32 0.0, %v993
        %995 = vmatmul.bf16.gmra.mxu0 %v974
        %v996 = vpop.f32.mrf.mxu0
        %v997 = vadd.f32 0.0, %v996
        %v998 = vpop.f32.mrf.mxu0
        %v999 = vadd.f32 0.0, %v998
        %1000 = vmatmul.bf16.gmra.mxu0 %v977
        %v1001 = vpop.f32.mrf.mxu0
        %v1002 = vadd.f32 0.0, %v1001
        %v1003 = vpop.f32.mrf.mxu0
        %v1004 = vadd.f32 0.0, %v1003
        %1005 = vmatmul.bf16.gmra.mxu0 %v980
        %v1006 = vpop.f32.mrf.mxu0
        %v1007 = vadd.f32 0.0, %v1006
        %v1008 = vpop.f32.mrf.mxu0
        %v1009 = vadd.f32 0.0, %v1008
        %1010 = vdwg.mxu0
        %1011 = vmatpush.bf16.msra.mxu0 0
        %1012 = vmatpush.bf16.msra.mxu0 0
        %1013 = vmatpush.bf16.msra.mxu0 0
        %1014 = vmatpush.bf16.msra.mxu0 0
        %1015 = vmatpush.bf16.msra.mxu0 0
        %1016 = vmatpush.bf16.msra.mxu0 0
        %1017 = vmatpush.bf16.msra.mxu0 0
        %1018 = vmatpush.bf16.msra.mxu0 %v967
        %1019 = vmatmul.bf16.gmra.mxu0 %v971
        %v1020 = vpop.f32.mrf.mxu0
        %v1021 = vadd.f32 0.0, %v1020
        %v1022 = vpop.f32.mrf.mxu0
        %v1023 = vadd.f32 0.0, %v1022
        %1024 = vmatmul.bf16.gmra.mxu0 %v974
        %v1025 = vpop.f32.mrf.mxu0
        %v1026 = vadd.f32 0.0, %v1025
        %v1027 = vpop.f32.mrf.mxu0
        %v1028 = vadd.f32 0.0, %v1027
        %1029 = vmatmul.bf16.gmra.mxu0 %v977
        %v1030 = vpop.f32.mrf.mxu0
        %v1031 = vadd.f32 0.0, %v1030
        %v1032 = vpop.f32.mrf.mxu0
        %v1033 = vadd.f32 0.0, %v1032
        %1034 = vmatmul.bf16.gmra.mxu0 %v980
        %v1035 = vpop.f32.mrf.mxu0
        %v1036 = vadd.f32 0.0, %v1035
        %v1037 = vpop.f32.mrf.mxu0
        %v1038 = vadd.f32 0.0, %v1037
        %1039 = vdwg.mxu0
        %v1040 = vadd.f32 %v856, %v992
        %v1041 = vadd.f32 %v857, %v1021
        %v1042 = vadd.f32 %v858, %v994
        %v1043 = vadd.f32 %v859, %v1023
        %v1044 = vadd.f32 %v860, %v997
        %v1045 = vadd.f32 %v861, %v1026
        %v1046 = vadd.f32 %v862, %v999
        %v1047 = vadd.f32 %v863, %v1028
        %v1048 = vadd.f32 %v864, %v1002
        %v1049 = vadd.f32 %v865, %v1031
        %v1050 = vadd.f32 %v866, %v1004
        %v1051 = vadd.f32 %v867, %v1033
        %v1052 = vadd.f32 %v868, %v1007
        %v1053 = vadd.f32 %v869, %v1036
        %v1054 = vadd.f32 %v870, %v1009
        %v1055 = vadd.f32 %v871, %v1038
        %vm1056 = vcmask 1045504
        %v1057 = vrot.slane %v400, 2
        %v1058 = vrot.slane %v401, 2
        %v1059 = vsel %vm1056, %v1057, %v1058
        %v1060 = vrot.slane %v402, 2
        %v1061 = vsel %vm1056, %v1058, %v1060
        %v1062 = vrot.slane %v403, 2
        %v1063 = vsel %vm1056, %v1060, %v1062
        %v1064 = vrot.slane %v404, 2
        %v1065 = vsel %vm1056, %v1062, %v1064
        %v1066 = vrot.slane %v405, 2
        %v1067 = vsel %vm1056, %v1064, %v1066
        %v1068 = vrot.slane %v406, 2
        %v1069 = vsel %vm1056, %v1066, %v1068
        %v1070 = vrot.slane %v407, 2
        %v1071 = vsel %vm1056, %v1068, %v1070
        %v1080 = vsel %vm1056, %v1070, 0.0
        %v1081 = vadd.s32 %v417, 2
        %v1082 = vadd.s32 %v418, 2
        %v1083 = vadd.s32 %v419, 2
        %v1084 = vadd.s32 %v420, 2
        %v1085 = vadd.s32 %v421, 2
        %v1086 = vadd.s32 %v422, 2
        %v1087 = vadd.s32 %v423, 2
        %v1088 = vadd.s32 %v424, 2
        %vm1089 = vcmp.ge.s32.totalorder %v1081, 0
        %vm1090 = vcmp.ge.s32.totalorder %v1082, 0
        %vm1091 = vcmp.ge.s32.totalorder %v1083, 0
        %vm1092 = vcmp.ge.s32.totalorder %v1084, 0
        %vm1093 = vcmp.ge.s32.totalorder %v1085, 0
        %vm1094 = vcmp.ge.s32.totalorder %v1086, 0
        %vm1095 = vcmp.ge.s32.totalorder %v1087, 0
        %vm1096 = vcmp.ge.s32.totalorder %v1088, 0
        %vm1097 = vcmp.lt.s32.totalorder %v1081, 16
        %vm1098 = vcmp.lt.s32.totalorder %v1082, 16
        %vm1099 = vcmp.lt.s32.totalorder %v1083, 16
        %vm1100 = vcmp.lt.s32.totalorder %v1084, 16
        %vm1101 = vcmp.lt.s32.totalorder %v1085, 16
        %vm1102 = vcmp.lt.s32.totalorder %v1086, 16
        %vm1103 = vcmp.lt.s32.totalorder %v1087, 16
        %vm1104 = vcmp.lt.s32.totalorder %v1088, 16
        %vm1105 = vmand %vm1089, %vm1097
        %vm1106 = vmand %vm1090, %vm1098
        %vm1107 = vmand %vm1091, %vm1099
        %vm1108 = vmand %vm1092, %vm1100
        %vm1109 = vmand %vm1093, %vm1101
        %vm1110 = vmand %vm1094, %vm1102
        %vm1111 = vmand %vm1095, %vm1103
        %vm1112 = vmand %vm1096, %vm1104
        %v1113 = vsel %vm1105, 1, 0
        %v1114 = vsel %vm1106, 1, 0
        %v1115 = vsel %vm1107, 1, 0
        %v1116 = vsel %vm1108, 1, 0
        %v1117 = vsel %vm1109, 1, 0
        %v1118 = vsel %vm1110, 1, 0
        %v1119 = vsel %vm1111, 1, 0
        %v1120 = vsel %vm1112, 1, 0
        %vm1121 = vcmp.eq.s32.totalorder %v1113, 1
        %vm1122 = vcmp.eq.s32.totalorder %v1114, 1
        %vm1123 = vcmp.eq.s32.totalorder %v1115, 1
        %vm1124 = vcmp.eq.s32.totalorder %v1116, 1
        %vm1125 = vcmp.eq.s32.totalorder %v1117, 1
        %vm1126 = vcmp.eq.s32.totalorder %v1118, 1
        %vm1127 = vcmp.eq.s32.totalorder %v1119, 1
        %vm1128 = vcmp.eq.s32.totalorder %v1120, 1
        %v1129 = vsel %vm1121, %v1059, 0.0
        %v1130 = vsel %vm1122, %v1061, 0.0
        %v1131 = vsel %vm1123, %v1063, 0.0
        %v1132 = vsel %vm1124, %v1065, 0.0
        %v1133 = vsel %vm1125, %v1067, 0.0
        %v1134 = vsel %vm1126, %v1069, 0.0
        %v1135 = vsel %vm1127, %v1071, 0.0
        %v1136 = vsel %vm1128, %v1080, 0.0
        %v1137 = vpack.c.bf16 %v1130, %v1129
        %v1138 = vpack.c.bf16 %v1132, %v1131
        %v1139 = vpack.c.bf16 %v1134, %v1133
        %v1140 = vpack.c.bf16 %v1136, %v1135
        %s1141 = scalar_lea.vmem [#allocation3], 64
        %v1142 = vld [vmem:[%s1141] sm:$0xff]
        %v1143 = vld [vmem:[%s1141 + $0x8] sm:$0xff]
        %v1146 = vunpack.c.l.b16 %v1142
        %v1147 = vunpack.c.h.b16 %v1142
        %v1148 = vunpack.c.l.b16 %v1143
        %v1149 = vunpack.c.h.b16 %v1143
        %v1150 = vpack.c.b16 %v1148, %v1146
        %v1151 = vpack.c.b16 %v1149, %v1147
        %v1155 = vsel %vm618, %v1137, 0
        %v1158 = vsel %vm618, %v1138, 0
        %v1161 = vsel %vm618, %v1139, 0
        %v1164 = vsel %vm618, %v1140, 0
        %1166 = vmatpush.bf16.msra.mxu0 0
        %1167 = vmatpush.bf16.msra.mxu0 0
        %1168 = vmatpush.bf16.msra.mxu0 0
        %1169 = vmatpush.bf16.msra.mxu0 0
        %1170 = vmatpush.bf16.msra.mxu0 0
        %1171 = vmatpush.bf16.msra.mxu0 0
        %1172 = vmatpush.bf16.msra.mxu0 0
        %1173 = vmatpush.bf16.msra.mxu0 %v1150
        %1174 = vmatmul.bf16.gmra.mxu0 %v1155
        %v1175 = vpop.f32.mrf.mxu0
        %v1176 = vadd.f32 0.0, %v1175
        %v1177 = vpop.f32.mrf.mxu0
        %v1178 = vadd.f32 0.0, %v1177
        %1179 = vmatmul.bf16.gmra.mxu0 %v1158
        %v1180 = vpop.f32.mrf.mxu0
        %v1181 = vadd.f32 0.0, %v1180
        %v1182 = vpop.f32.mrf.mxu0
        %v1183 = vadd.f32 0.0, %v1182
        %1184 = vmatmul.bf16.gmra.mxu0 %v1161
        %v1185 = vpop.f32.mrf.mxu0
        %v1186 = vadd.f32 0.0, %v1185
        %v1187 = vpop.f32.mrf.mxu0
        %v1188 = vadd.f32 0.0, %v1187
        %1189 = vmatmul.bf16.gmra.mxu0 %v1164
        %v1190 = vpop.f32.mrf.mxu0
        %v1191 = vadd.f32 0.0, %v1190
        %v1192 = vpop.f32.mrf.mxu0
        %v1193 = vadd.f32 0.0, %v1192
        %1194 = vdwg.mxu0
        %1195 = vmatpush.bf16.msra.mxu0 0
        %1196 = vmatpush.bf16.msra.mxu0 0
        %1197 = vmatpush.bf16.msra.mxu0 0
        %1198 = vmatpush.bf16.msra.mxu0 0
        %1199 = vmatpush.bf16.msra.mxu0 0
        %1200 = vmatpush.bf16.msra.mxu0 0
        %1201 = vmatpush.bf16.msra.mxu0 0
        %1202 = vmatpush.bf16.msra.mxu0 %v1151
        %1203 = vmatmul.bf16.gmra.mxu0 %v1155
        %v1204 = vpop.f32.mrf.mxu0
        %v1205 = vadd.f32 0.0, %v1204
        %v1206 = vpop.f32.mrf.mxu0
        %v1207 = vadd.f32 0.0, %v1206
        %1208 = vmatmul.bf16.gmra.mxu0 %v1158
        %v1209 = vpop.f32.mrf.mxu0
        %v1210 = vadd.f32 0.0, %v1209
        %v1211 = vpop.f32.mrf.mxu0
        %v1212 = vadd.f32 0.0, %v1211
        %1213 = vmatmul.bf16.gmra.mxu0 %v1161
        %v1214 = vpop.f32.mrf.mxu0
        %v1215 = vadd.f32 0.0, %v1214
        %v1216 = vpop.f32.mrf.mxu0
        %v1217 = vadd.f32 0.0, %v1216
        %1218 = vmatmul.bf16.gmra.mxu0 %v1164
        %v1219 = vpop.f32.mrf.mxu0
        %v1220 = vadd.f32 0.0, %v1219
        %v1221 = vpop.f32.mrf.mxu0
        %v1222 = vadd.f32 0.0, %v1221
        %1223 = vdwg.mxu0
        %v1224 = vadd.f32 %v1040, %v1176
        %v1225 = vadd.f32 %v1041, %v1205
        %v1226 = vadd.f32 %v1042, %v1178
        %v1227 = vadd.f32 %v1043, %v1207
        %v1228 = vadd.f32 %v1044, %v1181
        %v1229 = vadd.f32 %v1045, %v1210
        %v1230 = vadd.f32 %v1046, %v1183
        %v1231 = vadd.f32 %v1047, %v1212
        %v1232 = vadd.f32 %v1048, %v1186
        %v1233 = vadd.f32 %v1049, %v1215
        %v1234 = vadd.f32 %v1050, %v1188
        %v1235 = vadd.f32 %v1051, %v1217
        %v1236 = vadd.f32 %v1052, %v1191
        %v1237 = vadd.f32 %v1053, %v1220
        %v1238 = vadd.f32 %v1054, %v1193
        %v1239 = vadd.f32 %v1055, %v1222
        %v1240 = vmax.f32 %v1224, %v1225
        %v1241 = vmax.f32 %v1226, %v1227
        %v1242 = vmax.f32 %v1228, %v1229
        %v1243 = vmax.f32 %v1230, %v1231
        %v1244 = vmax.f32 %v1232, %v1233
        %v1245 = vmax.f32 %v1234, %v1235
        %v1246 = vmax.f32 %v1236, %v1237
        %v1247 = vmax.f32 %v1238, %v1239
        %v1248 = vld [vmem:[%s2] sm:$0x1]
        %v1250 = vperm.slane %v1248, 0
        %v1252 = vadd.f32 %v1240, %v1250
        %v1253 = vadd.f32 %v1241, %v1250
        %v1254 = vadd.f32 %v1242, %v1250
        %v1255 = vadd.f32 %v1243, %v1250
        %v1256 = vadd.f32 %v1244, %v1250
        %v1257 = vadd.f32 %v1245, %v1250
        %v1258 = vadd.f32 %v1246, %v1250
        %v1259 = vadd.f32 %v1247, %v1250
        %1260 = vst [vmem:[#allocation2] sm:$0xff] %v1252
        %1261 = vst [vmem:[#allocation2 + $0x8] sm:$0xff] %v1253
        %1262 = vst [vmem:[#allocation2 + $0x10] sm:$0xff] %v1254
        %1263 = vst [vmem:[#allocation2 + $0x18] sm:$0xff] %v1255
        %1264 = vst [vmem:[#allocation2 + $0x20] sm:$0xff] %v1256
        %1265 = vst [vmem:[#allocation2 + $0x28] sm:$0xff] %v1257
        %1266 = vst [vmem:[#allocation2 + $0x30] sm:$0xff] %v1258
        %1267 = vst [vmem:[#allocation2 + $0x38] sm:$0xff] %v1259
        %v1268 = vld [vmem:[#allocation2] ss:$2 sm:$0xff]
        %s1269 = scalar_lea.vmem [#allocation2], 16
        %v1270 = vld [vmem:[%s1269] ss:$2 sm:$0xff]
        %s1271 = scalar_lea.vmem [#allocation2], 32
        %v1272 = vld [vmem:[%s1271] ss:$2 sm:$0xff]
        %s1273 = scalar_lea.vmem [#allocation2], 48
        %v1274 = vld [vmem:[%s1273] ss:$2 sm:$0xff]
        %s1275 = scalar_lea.vmem [#allocation2], 1
        %v1276 = vld [vmem:[%s1275] ss:$2 sm:$0xff]
        %s1277 = scalar_lea.vmem [#allocation2], 17
        %v1278 = vld [vmem:[%s1277] ss:$2 sm:$0xff]
        %s1279 = scalar_lea.vmem [#allocation2], 33
        %v1280 = vld [vmem:[%s1279] ss:$2 sm:$0xff]
        %s1281 = scalar_lea.vmem [#allocation2], 49
        %v1282 = vld [vmem:[%s1281] ss:$2 sm:$0xff]
        %v1283 = vmax.f32 %v1268, %v1276
        %v1284 = vmax.f32 %v1270, %v1278
        %v1285 = vmax.f32 %v1272, %v1280
        %v1286 = vmax.f32 %v1274, %v1282
        %v1287 = vmax.f32 %v1283, 0.0
        %v1288 = vmax.f32 %v1284, 0.0
        %v1289 = vmax.f32 %v1285, 0.0
        %v1290 = vmax.f32 %v1286, 0.0
        %v1291 = vand.u32 %v409, 7
        %v1292 = vand.u32 %v410, 7
        %v1293 = vand.u32 %v411, 7
        %v1294 = vand.u32 %v412, 7
        %v1299 = vrot.slane %v1287, 7
        %v1300 = vrot.slane %v1288, 7
        %v1301 = vsel %vm520, %v1299, %v1300
        %v1302 = vrot.slane %v1289, 7
        %v1303 = vsel %vm520, %v1300, %v1302
        %v1304 = vrot.slane %v1290, 7
        %v1305 = vsel %vm520, %v1302, %v1304
        %v1310 = vsel %vm520, 0.0, %v1299
        %v1311 = vadd.s32 %v1291, 4294967295
        %v1312 = vadd.s32 %v1292, 4294967295
        %v1313 = vadd.s32 %v1293, 4294967295
        %v1314 = vadd.s32 %v1294, 4294967295
        %vm1315 = vcmp.ge.s32.totalorder %v1311, 0
        %vm1316 = vcmp.ge.s32.totalorder %v1312, 0
        %vm1317 = vcmp.ge.s32.totalorder %v1313, 0
        %vm1318 = vcmp.ge.s32.totalorder %v1314, 0
        %vm1319 = vcmp.lt.s32.totalorder %v1311, 8
        %vm1320 = vcmp.lt.s32.totalorder %v1312, 8
        %vm1321 = vcmp.lt.s32.totalorder %v1313, 8
        %vm1322 = vcmp.lt.s32.totalorder %v1314, 8
        %vm1323 = vmand %vm1315, %vm1319
        %vm1324 = vmand %vm1316, %vm1320
        %vm1325 = vmand %vm1317, %vm1321
        %vm1326 = vmand %vm1318, %vm1322
        %v1327 = vsel %vm1323, 1, 0
        %v1328 = vsel %vm1324, 1, 0
        %v1329 = vsel %vm1325, 1, 0
        %v1330 = vsel %vm1326, 1, 0
        %vm1331 = vcmp.eq.s32.totalorder %v1327, 1
        %vm1332 = vcmp.eq.s32.totalorder %v1328, 1
        %vm1333 = vcmp.eq.s32.totalorder %v1329, 1
        %vm1334 = vcmp.eq.s32.totalorder %v1330, 1
        %v1335 = vsel %vm1331, %v1310, 0.0
        %v1336 = vsel %vm1332, %v1301, 0.0
        %v1337 = vsel %vm1333, %v1303, 0.0
        %v1338 = vsel %vm1334, %v1305, 0.0
        %v1339 = vrot.slane %v1287, 1
        %v1340 = vrot.slane %v1288, 1
        %v1341 = vsel %vm872, %v1339, %v1340
        %v1342 = vrot.slane %v1289, 1
        %v1343 = vsel %vm872, %v1340, %v1342
        %v1344 = vrot.slane %v1290, 1
        %v1345 = vsel %vm872, %v1342, %v1344
        %v1350 = vsel %vm872, %v1344, 0.0
        %v1351 = vadd.s32 %v1291, 1
        %v1352 = vadd.s32 %v1292, 1
        %v1353 = vadd.s32 %v1293, 1
        %v1354 = vadd.s32 %v1294, 1
        %vm1355 = vcmp.ge.s32.totalorder %v1351, 0
        %vm1356 = vcmp.ge.s32.totalorder %v1352, 0
        %vm1357 = vcmp.ge.s32.totalorder %v1353, 0
        %vm1358 = vcmp.ge.s32.totalorder %v1354, 0
        %vm1359 = vcmp.lt.s32.totalorder %v1351, 8
        %vm1360 = vcmp.lt.s32.totalorder %v1352, 8
        %vm1361 = vcmp.lt.s32.totalorder %v1353, 8
        %vm1362 = vcmp.lt.s32.totalorder %v1354, 8
        %vm1363 = vmand %vm1355, %vm1359
        %vm1364 = vmand %vm1356, %vm1360
        %vm1365 = vmand %vm1357, %vm1361
        %vm1366 = vmand %vm1358, %vm1362
        %v1367 = vsel %vm1363, 1, 0
        %v1368 = vsel %vm1364, 1, 0
        %v1369 = vsel %vm1365, 1, 0
        %v1370 = vsel %vm1366, 1, 0
        %vm1371 = vcmp.eq.s32.totalorder %v1367, 1
        %vm1372 = vcmp.eq.s32.totalorder %v1368, 1
        %vm1373 = vcmp.eq.s32.totalorder %v1369, 1
        %vm1374 = vcmp.eq.s32.totalorder %v1370, 1
        %v1375 = vsel %vm1371, %v1341, 0.0
        %v1376 = vsel %vm1372, %v1343, 0.0
        %v1377 = vsel %vm1373, %v1345, 0.0
        %v1378 = vsel %vm1374, %v1350, 0.0
        %v1379 = vpack.c.bf16 %v1336, %v1335
        %v1380 = vpack.c.bf16 %v1288, %v1287
        %v1381 = vpack.c.bf16 %v1376, %v1375
        %v1382 = vpack.c.bf16 %v1338, %v1337
        %v1383 = vpack.c.bf16 %v1290, %v1289
        %v1384 = vpack.c.bf16 %v1378, %v1377
        %v1385 = vld [vmem:[#allocation6] sm:$0xff]
        %v1386 = vld [vmem:[#allocation6 + $0x8] sm:$0xff]
        %v1387 = vld [vmem:[#allocation6 + $0x10] sm:$0xff]
        %v1388 = vld [vmem:[#allocation6 + $0x18] sm:$0xff]
        %v1389 = vld [vmem:[#allocation6 + $0x20] sm:$0xff]
        %v1390 = vld [vmem:[#allocation6 + $0x28] sm:$0xff]
        %v1391 = vld [vmem:[#allocation6 + $0x30] sm:$0xff]
        %v1392 = vld [vmem:[#allocation6 + $0x38] sm:$0xff]
        %v1393 = vld [vmem:[#allocation6 + $0x40] sm:$0xff]
        %v1394 = vld [vmem:[#allocation6 + $0x48] sm:$0xff]
        %v1395 = vld [vmem:[#allocation6 + $0x50] sm:$0xff]
        %v1396 = vld [vmem:[#allocation6 + $0x58] sm:$0xff]
        %v1397 = vld [vmem:[#allocation6 + $0x60] sm:$0xff]
        %v1398 = vld [vmem:[#allocation6 + $0x68] sm:$0xff]
        %v1399 = vld [vmem:[#allocation6 + $0x70] sm:$0xff]
        %v1400 = vld [vmem:[#allocation6 + $0x78] sm:$0xff]
        %v1401 = vld [vmem:[#allocation6 + $0x80] sm:$0xff]
        %v1402 = vld [vmem:[#allocation6 + $0x88] sm:$0xff]
        %v1403 = vld [vmem:[#allocation6 + $0x90] sm:$0xff]
        %v1404 = vld [vmem:[#allocation6 + $0x98] sm:$0xff]
        %v1405 = vld [vmem:[#allocation6 + $0xa0] sm:$0xff]
        %v1406 = vld [vmem:[#allocation6 + $0xa8] sm:$0xff]
        %v1407 = vld [vmem:[#allocation6 + $0xb0] sm:$0xff]
        %v1408 = vld [vmem:[#allocation6 + $0xb8] sm:$0xff]
        %v1409 = vld [vmem:[#allocation6 + $0xc0] sm:$0xff]
        %v1410 = vld [vmem:[#allocation6 + $0xc8] sm:$0xff]
        %v1411 = vld [vmem:[#allocation6 + $0xd0] sm:$0xff]
        %v1412 = vld [vmem:[#allocation6 + $0xd8] sm:$0xff]
        %v1413 = vld [vmem:[#allocation6 + $0xe0] sm:$0xff]
        %v1414 = vld [vmem:[#allocation6 + $0xe8] sm:$0xff]
        %v1415 = vld [vmem:[#allocation6 + $0xf0] sm:$0xff]
        %v1416 = vld [vmem:[#allocation6 + $0xf8] sm:$0xff]
        %v1417 = vld [vmem:[#allocation6 + $0x100] sm:$0xff]
        %v1418 = vld [vmem:[#allocation6 + $0x108] sm:$0xff]
        %v1419 = vld [vmem:[#allocation6 + $0x110] sm:$0xff]
        %v1420 = vld [vmem:[#allocation6 + $0x118] sm:$0xff]
        %v1421 = vld [vmem:[#allocation6 + $0x120] sm:$0xff]
        %v1422 = vld [vmem:[#allocation6 + $0x128] sm:$0xff]
        %v1423 = vld [vmem:[#allocation6 + $0x130] sm:$0xff]
        %v1424 = vld [vmem:[#allocation6 + $0x138] sm:$0xff]
        %v1425 = vld [vmem:[#allocation6 + $0x140] sm:$0xff]
        %v1426 = vld [vmem:[#allocation6 + $0x148] sm:$0xff]
        %v1427 = vld [vmem:[#allocation6 + $0x150] sm:$0xff]
        %v1428 = vld [vmem:[#allocation6 + $0x158] sm:$0xff]
        %v1429 = vld [vmem:[#allocation6 + $0x160] sm:$0xff]
        %v1430 = vld [vmem:[#allocation6 + $0x168] sm:$0xff]
        %v1431 = vld [vmem:[#allocation6 + $0x170] sm:$0xff]
        %v1432 = vld [vmem:[#allocation6 + $0x178] sm:$0xff]
        %v1481 = vunpack.c.l.b16 %v1385
        %v1482 = vunpack.c.h.b16 %v1385
        %v1483 = vunpack.c.l.b16 %v1386
        %v1484 = vunpack.c.h.b16 %v1386
        %v1485 = vunpack.c.l.b16 %v1387
        %v1486 = vunpack.c.h.b16 %v1387
        %v1487 = vunpack.c.l.b16 %v1388
        %v1488 = vunpack.c.h.b16 %v1388
        %v1489 = vunpack.c.l.b16 %v1389
        %v1490 = vunpack.c.h.b16 %v1389
        %v1491 = vunpack.c.l.b16 %v1390
        %v1492 = vunpack.c.h.b16 %v1390
        %v1493 = vunpack.c.l.b16 %v1391
        %v1494 = vunpack.c.h.b16 %v1391
        %v1495 = vunpack.c.l.b16 %v1392
        %v1496 = vunpack.c.h.b16 %v1392
        %v1497 = vunpack.c.l.b16 %v1393
        %v1498 = vunpack.c.h.b16 %v1393
        %v1499 = vunpack.c.l.b16 %v1394
        %v1500 = vunpack.c.h.b16 %v1394
        %v1501 = vunpack.c.l.b16 %v1395
        %v1502 = vunpack.c.h.b16 %v1395
        %v1503 = vunpack.c.l.b16 %v1396
        %v1504 = vunpack.c.h.b16 %v1396
        %v1505 = vunpack.c.l.b16 %v1397
        %v1506 = vunpack.c.h.b16 %v1397
        %v1507 = vunpack.c.l.b16 %v1398
        %v1508 = vunpack.c.h.b16 %v1398
        %v1509 = vunpack.c.l.b16 %v1399
        %v1510 = vunpack.c.h.b16 %v1399
        %v1511 = vunpack.c.l.b16 %v1400
        %v1512 = vunpack.c.h.b16 %v1400
        %v1513 = vunpack.c.l.b16 %v1401
        %v1514 = vunpack.c.h.b16 %v1401
        %v1515 = vunpack.c.l.b16 %v1402
        %v1516 = vunpack.c.h.b16 %v1402
        %v1517 = vunpack.c.l.b16 %v1403
        %v1518 = vunpack.c.h.b16 %v1403
        %v1519 = vunpack.c.l.b16 %v1404
        %v1520 = vunpack.c.h.b16 %v1404
        %v1521 = vunpack.c.l.b16 %v1405
        %v1522 = vunpack.c.h.b16 %v1405
        %v1523 = vunpack.c.l.b16 %v1406
        %v1524 = vunpack.c.h.b16 %v1406
        %v1525 = vunpack.c.l.b16 %v1407
        %v1526 = vunpack.c.h.b16 %v1407
        %v1527 = vunpack.c.l.b16 %v1408
        %v1528 = vunpack.c.h.b16 %v1408
        %v1529 = vunpack.c.l.b16 %v1409
        %v1530 = vunpack.c.h.b16 %v1409
        %v1531 = vunpack.c.l.b16 %v1410
        %v1532 = vunpack.c.h.b16 %v1410
        %v1533 = vunpack.c.l.b16 %v1411
        %v1534 = vunpack.c.h.b16 %v1411
        %v1535 = vunpack.c.l.b16 %v1412
        %v1536 = vunpack.c.h.b16 %v1412
        %v1537 = vunpack.c.l.b16 %v1413
        %v1538 = vunpack.c.h.b16 %v1413
        %v1539 = vunpack.c.l.b16 %v1414
        %v1540 = vunpack.c.h.b16 %v1414
        %v1541 = vunpack.c.l.b16 %v1415
        %v1542 = vunpack.c.h.b16 %v1415
        %v1543 = vunpack.c.l.b16 %v1416
        %v1544 = vunpack.c.h.b16 %v1416
        %v1545 = vunpack.c.l.b16 %v1417
        %v1546 = vunpack.c.h.b16 %v1417
        %v1547 = vunpack.c.l.b16 %v1418
        %v1548 = vunpack.c.h.b16 %v1418
        %v1549 = vunpack.c.l.b16 %v1419
        %v1550 = vunpack.c.h.b16 %v1419
        %v1551 = vunpack.c.l.b16 %v1420
        %v1552 = vunpack.c.h.b16 %v1420
        %v1553 = vunpack.c.l.b16 %v1421
        %v1554 = vunpack.c.h.b16 %v1421
        %v1555 = vunpack.c.l.b16 %v1422
        %v1556 = vunpack.c.h.b16 %v1422
        %v1557 = vunpack.c.l.b16 %v1423
        %v1558 = vunpack.c.h.b16 %v1423
        %v1559 = vunpack.c.l.b16 %v1424
        %v1560 = vunpack.c.h.b16 %v1424
        %v1561 = vunpack.c.l.b16 %v1425
        %v1562 = vunpack.c.h.b16 %v1425
        %v1563 = vunpack.c.l.b16 %v1426
        %v1564 = vunpack.c.h.b16 %v1426
        %v1565 = vunpack.c.l.b16 %v1427
        %v1566 = vunpack.c.h.b16 %v1427
        %v1567 = vunpack.c.l.b16 %v1428
        %v1568 = vunpack.c.h.b16 %v1428
        %v1569 = vunpack.c.l.b16 %v1429
        %v1570 = vunpack.c.h.b16 %v1429
        %v1571 = vunpack.c.l.b16 %v1430
        %v1572 = vunpack.c.h.b16 %v1430
        %v1573 = vunpack.c.l.b16 %v1431
        %v1574 = vunpack.c.h.b16 %v1431
        %v1575 = vunpack.c.l.b16 %v1432
        %v1576 = vunpack.c.h.b16 %v1432
        %v1577 = vpack.c.b16 %v1483, %v1481
        %v1578 = vpack.c.b16 %v1484, %v1482
        %v1579 = vpack.c.b16 %v1487, %v1485
        %v1580 = vpack.c.b16 %v1488, %v1486
        %v1581 = vpack.c.b16 %v1491, %v1489
        %v1582 = vpack.c.b16 %v1492, %v1490
        %v1583 = vpack.c.b16 %v1495, %v1493
        %v1584 = vpack.c.b16 %v1496, %v1494
        %v1585 = vpack.c.b16 %v1499, %v1497
        %v1586 = vpack.c.b16 %v1500, %v1498
        %v1587 = vpack.c.b16 %v1503, %v1501
        %v1588 = vpack.c.b16 %v1504, %v1502
        %v1589 = vpack.c.b16 %v1507, %v1505
        %v1590 = vpack.c.b16 %v1508, %v1506
        %v1591 = vpack.c.b16 %v1511, %v1509
        %v1592 = vpack.c.b16 %v1512, %v1510
        %v1593 = vpack.c.b16 %v1515, %v1513
        %v1594 = vpack.c.b16 %v1516, %v1514
        %v1595 = vpack.c.b16 %v1519, %v1517
        %v1596 = vpack.c.b16 %v1520, %v1518
        %v1597 = vpack.c.b16 %v1523, %v1521
        %v1598 = vpack.c.b16 %v1524, %v1522
        %v1599 = vpack.c.b16 %v1527, %v1525
        %v1600 = vpack.c.b16 %v1528, %v1526
        %v1601 = vpack.c.b16 %v1531, %v1529
        %v1602 = vpack.c.b16 %v1532, %v1530
        %v1603 = vpack.c.b16 %v1535, %v1533
        %v1604 = vpack.c.b16 %v1536, %v1534
        %v1605 = vpack.c.b16 %v1539, %v1537
        %v1606 = vpack.c.b16 %v1540, %v1538
        %v1607 = vpack.c.b16 %v1543, %v1541
        %v1608 = vpack.c.b16 %v1544, %v1542
        %v1609 = vpack.c.b16 %v1547, %v1545
        %v1610 = vpack.c.b16 %v1548, %v1546
        %v1611 = vpack.c.b16 %v1551, %v1549
        %v1612 = vpack.c.b16 %v1552, %v1550
        %v1613 = vpack.c.b16 %v1555, %v1553
        %v1614 = vpack.c.b16 %v1556, %v1554
        %v1615 = vpack.c.b16 %v1559, %v1557
        %v1616 = vpack.c.b16 %v1560, %v1558
        %v1617 = vpack.c.b16 %v1563, %v1561
        %v1618 = vpack.c.b16 %v1564, %v1562
        %v1619 = vpack.c.b16 %v1567, %v1565
        %v1620 = vpack.c.b16 %v1568, %v1566
        %v1621 = vpack.c.b16 %v1571, %v1569
        %v1622 = vpack.c.b16 %v1572, %v1570
        %v1623 = vpack.c.b16 %v1575, %v1573
        %v1624 = vpack.c.b16 %v1576, %v1574
        %1673 = vmatpush.bf16.msra.mxu0 %v1591
        %1674 = vmatpush.bf16.msra.mxu0 %v1589
        %1675 = vmatpush.bf16.msra.mxu0 %v1587
        %1676 = vmatpush.bf16.msra.mxu0 %v1585
        %1677 = vmatpush.bf16.msra.mxu0 %v1583
        %1678 = vmatpush.bf16.msra.mxu0 %v1581
        %1679 = vmatpush.bf16.msra.mxu0 %v1579
        %1680 = vmatpush.bf16.msra.mxu0 %v1577
        %1681 = vmatmul.bf16.gmra.mxu0 %v1379
        %v1682 = vpop.f32.mrf.mxu0
        %v1683 = vadd.f32 0.0, %v1682
        %v1684 = vpop.f32.mrf.mxu0
        %v1685 = vadd.f32 0.0, %v1684
        %1686 = vmatmul.bf16.gmra.mxu0 %v1382
        %v1687 = vpop.f32.mrf.mxu0
        %v1688 = vadd.f32 0.0, %v1687
        %v1689 = vpop.f32.mrf.mxu0
        %v1690 = vadd.f32 0.0, %v1689
        %1691 = vdwg.mxu0
        %1692 = vmatpush.bf16.msra.mxu0 %v1607
        %1693 = vmatpush.bf16.msra.mxu0 %v1605
        %1694 = vmatpush.bf16.msra.mxu0 %v1603
        %1695 = vmatpush.bf16.msra.mxu0 %v1601
        %1696 = vmatpush.bf16.msra.mxu0 %v1599
        %1697 = vmatpush.bf16.msra.mxu0 %v1597
        %1698 = vmatpush.bf16.msra.mxu0 %v1595
        %1699 = vmatpush.bf16.msra.mxu0 %v1593
        %1700 = vmatmul.bf16.gmra.mxu0 %v1380
        %v1701 = vpop.f32.mrf.mxu0
        %v1702 = vadd.f32 %v1683, %v1701
        %v1703 = vpop.f32.mrf.mxu0
        %v1704 = vadd.f32 %v1685, %v1703
        %1705 = vmatmul.bf16.gmra.mxu0 %v1383
        %v1706 = vpop.f32.mrf.mxu0
        %v1707 = vadd.f32 %v1688, %v1706
        %v1708 = vpop.f32.mrf.mxu0
        %v1709 = vadd.f32 %v1690, %v1708
        %1710 = vdwg.mxu0
        %1711 = vmatpush.bf16.msra.mxu0 %v1623
        %1712 = vmatpush.bf16.msra.mxu0 %v1621
        %1713 = vmatpush.bf16.msra.mxu0 %v1619
        %1714 = vmatpush.bf16.msra.mxu0 %v1617
        %1715 = vmatpush.bf16.msra.mxu0 %v1615
        %1716 = vmatpush.bf16.msra.mxu0 %v1613
        %1717 = vmatpush.bf16.msra.mxu0 %v1611
        %1718 = vmatpush.bf16.msra.mxu0 %v1609
        %1719 = vmatmul.bf16.gmra.mxu0 %v1381
        %v1720 = vpop.f32.mrf.mxu0
        %v1721 = vadd.f32 %v1702, %v1720
        %v1722 = vpop.f32.mrf.mxu0
        %v1723 = vadd.f32 %v1704, %v1722
        %1724 = vmatmul.bf16.gmra.mxu0 %v1384
        %v1725 = vpop.f32.mrf.mxu0
        %v1726 = vadd.f32 %v1707, %v1725
        %v1727 = vpop.f32.mrf.mxu0
        %v1728 = vadd.f32 %v1709, %v1727
        %1729 = vdwg.mxu0
        %1730 = vmatpush.bf16.msra.mxu0 %v1592
        %1731 = vmatpush.bf16.msra.mxu0 %v1590
        %1732 = vmatpush.bf16.msra.mxu0 %v1588
        %1733 = vmatpush.bf16.msra.mxu0 %v1586
        %1734 = vmatpush.bf16.msra.mxu0 %v1584
        %1735 = vmatpush.bf16.msra.mxu0 %v1582
        %1736 = vmatpush.bf16.msra.mxu0 %v1580
        %1737 = vmatpush.bf16.msra.mxu0 %v1578
        %1738 = vmatmul.bf16.gmra.mxu0 %v1379
        %v1739 = vpop.f32.mrf.mxu0
        %v1740 = vadd.f32 0.0, %v1739
        %v1741 = vpop.f32.mrf.mxu0
        %v1742 = vadd.f32 0.0, %v1741
        %1743 = vmatmul.bf16.gmra.mxu0 %v1382
        %v1744 = vpop.f32.mrf.mxu0
        %v1745 = vadd.f32 0.0, %v1744
        %v1746 = vpop.f32.mrf.mxu0
        %v1747 = vadd.f32 0.0, %v1746
        %1748 = vdwg.mxu0
        %1749 = vmatpush.bf16.msra.mxu0 %v1608
        %1750 = vmatpush.bf16.msra.mxu0 %v1606
        %1751 = vmatpush.bf16.msra.mxu0 %v1604
        %1752 = vmatpush.bf16.msra.mxu0 %v1602
        %1753 = vmatpush.bf16.msra.mxu0 %v1600
        %1754 = vmatpush.bf16.msra.mxu0 %v1598
        %1755 = vmatpush.bf16.msra.mxu0 %v1596
        %1756 = vmatpush.bf16.msra.mxu0 %v1594
        %1757 = vmatmul.bf16.gmra.mxu0 %v1380
        %v1758 = vpop.f32.mrf.mxu0
        %v1759 = vadd.f32 %v1740, %v1758
        %v1760 = vpop.f32.mrf.mxu0
        %v1761 = vadd.f32 %v1742, %v1760
        %1762 = vmatmul.bf16.gmra.mxu0 %v1383
        %v1763 = vpop.f32.mrf.mxu0
        %v1764 = vadd.f32 %v1745, %v1763
        %v1765 = vpop.f32.mrf.mxu0
        %v1766 = vadd.f32 %v1747, %v1765
        %1767 = vdwg.mxu0
        %1768 = vmatpush.bf16.msra.mxu0 %v1624
        %1769 = vmatpush.bf16.msra.mxu0 %v1622
        %1770 = vmatpush.bf16.msra.mxu0 %v1620
        %1771 = vmatpush.bf16.msra.mxu0 %v1618
        %1772 = vmatpush.bf16.msra.mxu0 %v1616
        %1773 = vmatpush.bf16.msra.mxu0 %v1614
        %1774 = vmatpush.bf16.msra.mxu0 %v1612
        %1775 = vmatpush.bf16.msra.mxu0 %v1610
        %1776 = vmatmul.bf16.gmra.mxu0 %v1381
        %v1777 = vpop.f32.mrf.mxu0
        %v1778 = vadd.f32 %v1759, %v1777
        %v1779 = vpop.f32.mrf.mxu0
        %v1780 = vadd.f32 %v1761, %v1779
        %1781 = vmatmul.bf16.gmra.mxu0 %v1384
        %v1782 = vpop.f32.mrf.mxu0
        %v1783 = vadd.f32 %v1764, %v1782
        %v1784 = vpop.f32.mrf.mxu0
        %v1785 = vadd.f32 %v1766, %v1784
        %1786 = vdwg.mxu0
        %v1787 = vmax.f32 %v1721, %v1778
        %v1788 = vmax.f32 %v1723, %v1780
        %v1789 = vmax.f32 %v1726, %v1783
        %v1790 = vmax.f32 %v1728, %v1785
        %v1791 = vld [vmem:[%s4] sm:$0x1]
        %v1793 = vperm.slane %v1791, 0
        %v1795 = vadd.f32 %v1787, %v1793
        %v1796 = vadd.f32 %v1788, %v1793
        %v1797 = vadd.f32 %v1789, %v1793
        %v1798 = vadd.f32 %v1790, %v1793
        %1799 = vst [vmem:[#allocation2] sm:$0xff] %v1795
        %1800 = vst [vmem:[#allocation2 + $0x8] sm:$0xff] %v1796
        %1801 = vst [vmem:[#allocation2 + $0x10] sm:$0xff] %v1797
        %1802 = vst [vmem:[#allocation2 + $0x18] sm:$0xff] %v1798
        %v1803 = vld [vmem:[#allocation2] ss:$2 sm:$0xff]
        %s1804 = scalar_lea.vmem [#allocation2], 16
        %v1805 = vld [vmem:[%s1804] ss:$2 sm:$0xff]
        %v1806 = vld [vmem:[%s1275] ss:$2 sm:$0xff]
        %v1807 = vld [vmem:[%s1277] ss:$2 sm:$0xff]
        %v1808 = vmax.f32 %v1803, %v1806
        %v1809 = vmax.f32 %v1805, %v1807
        %v1810 = vmax.f32 %v1808, 0.0
        %v1811 = vmax.f32 %v1809, 0.0
        %v1812 = vand.u32 %v409, 3
        %v1813 = vand.u32 %v410, 3
        %v1816 = vrot.slane %v1810, 7
        %v1817 = vrot.slane %v1811, 7
        %v1818 = vsel %vm520, %v1816, %v1817
        %v1821 = vsel %vm520, 0.0, %v1816
        %v1822 = vadd.s32 %v1812, 4294967295
        %v1823 = vadd.s32 %v1813, 4294967295
        %vm1824 = vcmp.ge.s32.totalorder %v1822, 0
        %vm1825 = vcmp.ge.s32.totalorder %v1823, 0
        %vm1826 = vcmp.lt.s32.totalorder %v1822, 4
        %vm1827 = vcmp.lt.s32.totalorder %v1823, 4
        %vm1828 = vmand %vm1824, %vm1826
        %vm1829 = vmand %vm1825, %vm1827
        %v1830 = vsel %vm1828, 1, 0
        %v1831 = vsel %vm1829, 1, 0
        %vm1832 = vcmp.eq.s32.totalorder %v1830, 1
        %vm1833 = vcmp.eq.s32.totalorder %v1831, 1
        %v1834 = vsel %vm1832, %v1821, 0.0
        %v1835 = vsel %vm1833, %v1818, 0.0
        %v1836 = vrot.slane %v1810, 1
        %v1837 = vrot.slane %v1811, 1
        %v1838 = vsel %vm872, %v1836, %v1837
        %v1841 = vsel %vm872, %v1837, 0.0
        %v1842 = vadd.s32 %v1812, 1
        %v1843 = vadd.s32 %v1813, 1
        %vm1844 = vcmp.ge.s32.totalorder %v1842, 0
        %vm1845 = vcmp.ge.s32.totalorder %v1843, 0
        %vm1846 = vcmp.lt.s32.totalorder %v1842, 4
        %vm1847 = vcmp.lt.s32.totalorder %v1843, 4
        %vm1848 = vmand %vm1844, %vm1846
        %vm1849 = vmand %vm1845, %vm1847
        %v1850 = vsel %vm1848, 1, 0
        %v1851 = vsel %vm1849, 1, 0
        %vm1852 = vcmp.eq.s32.totalorder %v1850, 1
        %vm1853 = vcmp.eq.s32.totalorder %v1851, 1
        %v1854 = vsel %vm1852, %v1838, 0.0
        %v1855 = vsel %vm1853, %v1841, 0.0
        %v1856 = vpack.c.bf16 %v1835, %v1834
        %v1857 = vpack.c.bf16 %v1811, %v1810
        %v1858 = vpack.c.bf16 %v1855, %v1854
        %v1859 = vld [vmem:[#allocation8] sm:$0xff]
        %v1860 = vld [vmem:[#allocation8 + $0x8] sm:$0xff]
        %v1861 = vld [vmem:[#allocation8 + $0x10] sm:$0xff]
        %v1862 = vld [vmem:[#allocation8 + $0x18] sm:$0xff]
        %v1863 = vld [vmem:[#allocation8 + $0x20] sm:$0xff]
        %v1864 = vld [vmem:[#allocation8 + $0x28] sm:$0xff]
        %v1865 = vld [vmem:[#allocation8 + $0x30] sm:$0xff]
        %v1866 = vld [vmem:[#allocation8 + $0x38] sm:$0xff]
        %v1867 = vld [vmem:[#allocation8 + $0x40] sm:$0xff]
        %v1868 = vld [vmem:[#allocation8 + $0x48] sm:$0xff]
        %v1869 = vld [vmem:[#allocation8 + $0x50] sm:$0xff]
        %v1870 = vld [vmem:[#allocation8 + $0x58] sm:$0xff]
        %v1871 = vld [vmem:[#allocation8 + $0x60] sm:$0xff]
        %v1872 = vld [vmem:[#allocation8 + $0x68] sm:$0xff]
        %v1873 = vld [vmem:[#allocation8 + $0x70] sm:$0xff]
        %v1874 = vld [vmem:[#allocation8 + $0x78] sm:$0xff]
        %v1875 = vld [vmem:[#allocation8 + $0x80] sm:$0xff]
        %v1876 = vld [vmem:[#allocation8 + $0x88] sm:$0xff]
        %v1877 = vld [vmem:[#allocation8 + $0x90] sm:$0xff]
        %v1878 = vld [vmem:[#allocation8 + $0x98] sm:$0xff]
        %v1879 = vld [vmem:[#allocation8 + $0xa0] sm:$0xff]
        %v1880 = vld [vmem:[#allocation8 + $0xa8] sm:$0xff]
        %v1881 = vld [vmem:[#allocation8 + $0xb0] sm:$0xff]
        %v1882 = vld [vmem:[#allocation8 + $0xb8] sm:$0xff]
        %v1883 = vld [vmem:[#allocation8 + $0xc0] sm:$0xff]
        %v1884 = vld [vmem:[#allocation8 + $0xc8] sm:$0xff]
        %v1885 = vld [vmem:[#allocation8 + $0xd0] sm:$0xff]
        %v1886 = vld [vmem:[#allocation8 + $0xd8] sm:$0xff]
        %v1887 = vld [vmem:[#allocation8 + $0xe0] sm:$0xff]
        %v1888 = vld [vmem:[#allocation8 + $0xe8] sm:$0xff]
        %v1889 = vld [vmem:[#allocation8 + $0xf0] sm:$0xff]
        %v1890 = vld [vmem:[#allocation8 + $0xf8] sm:$0xff]
        %v1891 = vld [vmem:[#allocation8 + $0x100] sm:$0xff]
        %v1892 = vld [vmem:[#allocation8 + $0x108] sm:$0xff]
        %v1893 = vld [vmem:[#allocation8 + $0x110] sm:$0xff]
        %v1894 = vld [vmem:[#allocation8 + $0x118] sm:$0xff]
        %v1895 = vld [vmem:[#allocation8 + $0x120] sm:$0xff]
        %v1896 = vld [vmem:[#allocation8 + $0x128] sm:$0xff]
        %v1897 = vld [vmem:[#allocation8 + $0x130] sm:$0xff]
        %v1898 = vld [vmem:[#allocation8 + $0x138] sm:$0xff]
        %v1899 = vld [vmem:[#allocation8 + $0x140] sm:$0xff]
        %v1900 = vld [vmem:[#allocation8 + $0x148] sm:$0xff]
        %v1901 = vld [vmem:[#allocation8 + $0x150] sm:$0xff]
        %v1902 = vld [vmem:[#allocation8 + $0x158] sm:$0xff]
        %v1903 = vld [vmem:[#allocation8 + $0x160] sm:$0xff]
        %v1904 = vld [vmem:[#allocation8 + $0x168] sm:$0xff]
        %v1905 = vld [vmem:[#allocation8 + $0x170] sm:$0xff]
        %v1906 = vld [vmem:[#allocation8 + $0x178] sm:$0xff]
        %v1955 = vunpack.c.l.b16 %v1859
        %v1956 = vunpack.c.h.b16 %v1859
        %v1957 = vunpack.c.l.b16 %v1860
        %v1958 = vunpack.c.h.b16 %v1860
        %v1959 = vunpack.c.l.b16 %v1861
        %v1960 = vunpack.c.h.b16 %v1861
        %v1961 = vunpack.c.l.b16 %v1862
        %v1962 = vunpack.c.h.b16 %v1862
        %v1963 = vunpack.c.l.b16 %v1863
        %v1964 = vunpack.c.h.b16 %v1863
        %v1965 = vunpack.c.l.b16 %v1864
        %v1966 = vunpack.c.h.b16 %v1864
        %v1967 = vunpack.c.l.b16 %v1865
        %v1968 = vunpack.c.h.b16 %v1865
        %v1969 = vunpack.c.l.b16 %v1866
        %v1970 = vunpack.c.h.b16 %v1866
        %v1971 = vunpack.c.l.b16 %v1867
        %v1972 = vunpack.c.h.b16 %v1867
        %v1973 = vunpack.c.l.b16 %v1868
        %v1974 = vunpack.c.h.b16 %v1868
        %v1975 = vunpack.c.l.b16 %v1869
        %v1976 = vunpack.c.h.b16 %v1869
        %v1977 = vunpack.c.l.b16 %v1870
        %v1978 = vunpack.c.h.b16 %v1870
        %v1979 = vunpack.c.l.b16 %v1871
        %v1980 = vunpack.c.h.b16 %v1871
        %v1981 = vunpack.c.l.b16 %v1872
        %v1982 = vunpack.c.h.b16 %v1872
        %v1983 = vunpack.c.l.b16 %v1873
        %v1984 = vunpack.c.h.b16 %v1873
        %v1985 = vunpack.c.l.b16 %v1874
        %v1986 = vunpack.c.h.b16 %v1874
        %v1987 = vunpack.c.l.b16 %v1875
        %v1988 = vunpack.c.h.b16 %v1875
        %v1989 = vunpack.c.l.b16 %v1876
        %v1990 = vunpack.c.h.b16 %v1876
        %v1991 = vunpack.c.l.b16 %v1877
        %v1992 = vunpack.c.h.b16 %v1877
        %v1993 = vunpack.c.l.b16 %v1878
        %v1994 = vunpack.c.h.b16 %v1878
        %v1995 = vunpack.c.l.b16 %v1879
        %v1996 = vunpack.c.h.b16 %v1879
        %v1997 = vunpack.c.l.b16 %v1880
        %v1998 = vunpack.c.h.b16 %v1880
        %v1999 = vunpack.c.l.b16 %v1881
        %v2000 = vunpack.c.h.b16 %v1881
        %v2001 = vunpack.c.l.b16 %v1882
        %v2002 = vunpack.c.h.b16 %v1882
        %v2003 = vunpack.c.l.b16 %v1883
        %v2004 = vunpack.c.h.b16 %v1883
        %v2005 = vunpack.c.l.b16 %v1884
        %v2006 = vunpack.c.h.b16 %v1884
        %v2007 = vunpack.c.l.b16 %v1885
        %v2008 = vunpack.c.h.b16 %v1885
        %v2009 = vunpack.c.l.b16 %v1886
        %v2010 = vunpack.c.h.b16 %v1886
        %v2011 = vunpack.c.l.b16 %v1887
        %v2012 = vunpack.c.h.b16 %v1887
        %v2013 = vunpack.c.l.b16 %v1888
        %v2014 = vunpack.c.h.b16 %v1888
        %v2015 = vunpack.c.l.b16 %v1889
        %v2016 = vunpack.c.h.b16 %v1889
        %v2017 = vunpack.c.l.b16 %v1890
        %v2018 = vunpack.c.h.b16 %v1890
        %v2019 = vunpack.c.l.b16 %v1891
        %v2020 = vunpack.c.h.b16 %v1891
        %v2021 = vunpack.c.l.b16 %v1892
        %v2022 = vunpack.c.h.b16 %v1892
        %v2023 = vunpack.c.l.b16 %v1893
        %v2024 = vunpack.c.h.b16 %v1893
        %v2025 = vunpack.c.l.b16 %v1894
        %v2026 = vunpack.c.h.b16 %v1894
        %v2027 = vunpack.c.l.b16 %v1895
        %v2028 = vunpack.c.h.b16 %v1895
        %v2029 = vunpack.c.l.b16 %v1896
        %v2030 = vunpack.c.h.b16 %v1896
        %v2031 = vunpack.c.l.b16 %v1897
        %v2032 = vunpack.c.h.b16 %v1897
        %v2033 = vunpack.c.l.b16 %v1898
        %v2034 = vunpack.c.h.b16 %v1898
        %v2035 = vunpack.c.l.b16 %v1899
        %v2036 = vunpack.c.h.b16 %v1899
        %v2037 = vunpack.c.l.b16 %v1900
        %v2038 = vunpack.c.h.b16 %v1900
        %v2039 = vunpack.c.l.b16 %v1901
        %v2040 = vunpack.c.h.b16 %v1901
        %v2041 = vunpack.c.l.b16 %v1902
        %v2042 = vunpack.c.h.b16 %v1902
        %v2043 = vunpack.c.l.b16 %v1903
        %v2044 = vunpack.c.h.b16 %v1903
        %v2045 = vunpack.c.l.b16 %v1904
        %v2046 = vunpack.c.h.b16 %v1904
        %v2047 = vunpack.c.l.b16 %v1905
        %v2048 = vunpack.c.h.b16 %v1905
        %v2049 = vunpack.c.l.b16 %v1906
        %v2050 = vunpack.c.h.b16 %v1906
        %v2051 = vpack.c.b16 %v1957, %v1955
        %v2052 = vpack.c.b16 %v1958, %v1956
        %v2053 = vpack.c.b16 %v1961, %v1959
        %v2054 = vpack.c.b16 %v1962, %v1960
        %v2055 = vpack.c.b16 %v1965, %v1963
        %v2056 = vpack.c.b16 %v1966, %v1964
        %v2057 = vpack.c.b16 %v1969, %v1967
        %v2058 = vpack.c.b16 %v1970, %v1968
        %v2059 = vpack.c.b16 %v1973, %v1971
        %v2060 = vpack.c.b16 %v1974, %v1972
        %v2061 = vpack.c.b16 %v1977, %v1975
        %v2062 = vpack.c.b16 %v1978, %v1976
        %v2063 = vpack.c.b16 %v1981, %v1979
        %v2064 = vpack.c.b16 %v1982, %v1980
        %v2065 = vpack.c.b16 %v1985, %v1983
        %v2066 = vpack.c.b16 %v1986, %v1984
        %v2067 = vpack.c.b16 %v1989, %v1987
        %v2068 = vpack.c.b16 %v1990, %v1988
        %v2069 = vpack.c.b16 %v1993, %v1991
        %v2070 = vpack.c.b16 %v1994, %v1992
        %v2071 = vpack.c.b16 %v1997, %v1995
        %v2072 = vpack.c.b16 %v1998, %v1996
        %v2073 = vpack.c.b16 %v2001, %v1999
        %v2074 = vpack.c.b16 %v2002, %v2000
        %v2075 = vpack.c.b16 %v2005, %v2003
        %v2076 = vpack.c.b16 %v2006, %v2004
        %v2077 = vpack.c.b16 %v2009, %v2007
        %v2078 = vpack.c.b16 %v2010, %v2008
        %v2079 = vpack.c.b16 %v2013, %v2011
        %v2080 = vpack.c.b16 %v2014, %v2012
        %v2081 = vpack.c.b16 %v2017, %v2015
        %v2082 = vpack.c.b16 %v2018, %v2016
        %v2083 = vpack.c.b16 %v2021, %v2019
        %v2084 = vpack.c.b16 %v2022, %v2020
        %v2085 = vpack.c.b16 %v2025, %v2023
        %v2086 = vpack.c.b16 %v2026, %v2024
        %v2087 = vpack.c.b16 %v2029, %v2027
        %v2088 = vpack.c.b16 %v2030, %v2028
        %v2089 = vpack.c.b16 %v2033, %v2031
        %v2090 = vpack.c.b16 %v2034, %v2032
        %v2091 = vpack.c.b16 %v2037, %v2035
        %v2092 = vpack.c.b16 %v2038, %v2036
        %v2093 = vpack.c.b16 %v2041, %v2039
        %v2094 = vpack.c.b16 %v2042, %v2040
        %v2095 = vpack.c.b16 %v2045, %v2043
        %v2096 = vpack.c.b16 %v2046, %v2044
        %v2097 = vpack.c.b16 %v2049, %v2047
        %v2098 = vpack.c.b16 %v2050, %v2048
        %2147 = vmatpush.bf16.msra.mxu0 %v2065
        %2148 = vmatpush.bf16.msra.mxu0 %v2063
        %2149 = vmatpush.bf16.msra.mxu0 %v2061
        %2150 = vmatpush.bf16.msra.mxu0 %v2059
        %2151 = vmatpush.bf16.msra.mxu0 %v2057
        %2152 = vmatpush.bf16.msra.mxu0 %v2055
        %2153 = vmatpush.bf16.msra.mxu0 %v2053
        %2154 = vmatpush.bf16.msra.mxu0 %v2051
        %2155 = vmatmul.bf16.gmra.mxu0 %v1856
        %v2156 = vpop.f32.mrf.mxu0
        %v2157 = vadd.f32 0.0, %v2156
        %v2158 = vpop.f32.mrf.mxu0
        %v2159 = vadd.f32 0.0, %v2158
        %2160 = vdwg.mxu0
        %2161 = vmatpush.bf16.msra.mxu0 %v2081
        %2162 = vmatpush.bf16.msra.mxu0 %v2079
        %2163 = vmatpush.bf16.msra.mxu0 %v2077
        %2164 = vmatpush.bf16.msra.mxu0 %v2075
        %2165 = vmatpush.bf16.msra.mxu0 %v2073
        %2166 = vmatpush.bf16.msra.mxu0 %v2071
        %2167 = vmatpush.bf16.msra.mxu0 %v2069
        %2168 = vmatpush.bf16.msra.mxu0 %v2067
        %2169 = vmatmul.bf16.gmra.mxu0 %v1857
        %v2170 = vpop.f32.mrf.mxu0
        %v2171 = vadd.f32 %v2157, %v2170
        %v2172 = vpop.f32.mrf.mxu0
        %v2173 = vadd.f32 %v2159, %v2172
        %2174 = vdwg.mxu0
        %2175 = vmatpush.bf16.msra.mxu0 %v2097
        %2176 = vmatpush.bf16.msra.mxu0 %v2095
        %2177 = vmatpush.bf16.msra.mxu0 %v2093
        %2178 = vmatpush.bf16.msra.mxu0 %v2091
        %2179 = vmatpush.bf16.msra.mxu0 %v2089
        %2180 = vmatpush.bf16.msra.mxu0 %v2087
        %2181 = vmatpush.bf16.msra.mxu0 %v2085
        %2182 = vmatpush.bf16.msra.mxu0 %v2083
        %2183 = vmatmul.bf16.gmra.mxu0 %v1858
        %v2184 = vpop.f32.mrf.mxu0
        %v2185 = vadd.f32 %v2171, %v2184
        %v2186 = vpop.f32.mrf.mxu0
        %v2187 = vadd.f32 %v2173, %v2186
        %2188 = vdwg.mxu0
        %2189 = vmatpush.bf16.msra.mxu0 %v2066
        %2190 = vmatpush.bf16.msra.mxu0 %v2064
        %2191 = vmatpush.bf16.msra.mxu0 %v2062
        %2192 = vmatpush.bf16.msra.mxu0 %v2060
        %2193 = vmatpush.bf16.msra.mxu0 %v2058
        %2194 = vmatpush.bf16.msra.mxu0 %v2056
        %2195 = vmatpush.bf16.msra.mxu0 %v2054
        %2196 = vmatpush.bf16.msra.mxu0 %v2052
        %2197 = vmatmul.bf16.gmra.mxu0 %v1856
        %v2198 = vpop.f32.mrf.mxu0
        %v2199 = vadd.f32 0.0, %v2198
        %v2200 = vpop.f32.mrf.mxu0
        %v2201 = vadd.f32 0.0, %v2200
        %2202 = vdwg.mxu0
        %2203 = vmatpush.bf16.msra.mxu0 %v2082
        %2204 = vmatpush.bf16.msra.mxu0 %v2080
        %2205 = vmatpush.bf16.msra.mxu0 %v2078
        %2206 = vmatpush.bf16.msra.mxu0 %v2076
        %2207 = vmatpush.bf16.msra.mxu0 %v2074
        %2208 = vmatpush.bf16.msra.mxu0 %v2072
        %2209 = vmatpush.bf16.msra.mxu0 %v2070
        %2210 = vmatpush.bf16.msra.mxu0 %v2068
        %2211 = vmatmul.bf16.gmra.mxu0 %v1857
        %v2212 = vpop.f32.mrf.mxu0
        %v2213 = vadd.f32 %v2199, %v2212
        %v2214 = vpop.f32.mrf.mxu0
        %v2215 = vadd.f32 %v2201, %v2214
        %2216 = vdwg.mxu0
        %2217 = vmatpush.bf16.msra.mxu0 %v2098
        %2218 = vmatpush.bf16.msra.mxu0 %v2096
        %2219 = vmatpush.bf16.msra.mxu0 %v2094
        %2220 = vmatpush.bf16.msra.mxu0 %v2092
        %2221 = vmatpush.bf16.msra.mxu0 %v2090
        %2222 = vmatpush.bf16.msra.mxu0 %v2088
        %2223 = vmatpush.bf16.msra.mxu0 %v2086
        %2224 = vmatpush.bf16.msra.mxu0 %v2084
        %2225 = vmatmul.bf16.gmra.mxu0 %v1858
        %v2226 = vpop.f32.mrf.mxu0
        %v2227 = vadd.f32 %v2213, %v2226
        %v2228 = vpop.f32.mrf.mxu0
        %v2229 = vadd.f32 %v2215, %v2228
        %2230 = vdwg.mxu0
        %v2231 = vmax.f32 %v2185, %v2227
        %v2232 = vmax.f32 %v2187, %v2229
        %v2233 = vld [vmem:[%s6] sm:$0x1]
        %v2235 = vperm.slane %v2233, 0
        %v2237 = vadd.f32 %v2231, %v2235
        %v2238 = vadd.f32 %v2232, %v2235
        %2239 = vst [vmem:[#allocation2] sm:$0xff] %v2237
        %2240 = vst [vmem:[#allocation2 + $0x8] sm:$0xff] %v2238
        %v2241 = vld [vmem:[#allocation2] ss:$4 sm:$0xf]
        %v2242 = vld [vmem:[%s1275] ss:$4 sm:$0xf]
        %v2243 = vmax.f32 %v2241, %v2242
        %v2244 = vmax.f32 %v2243, 0.0
        %s2245 = scalar_lea.vmem [#allocation2], 2
        %v2246 = vld [vmem:[%s2245] ss:$4 sm:$0xf]
        %s2247 = scalar_lea.vmem [#allocation2], 3
        %v2248 = vld [vmem:[%s2247] ss:$4 sm:$0xf]
        %v2249 = vmax.f32 %v2246, %v2248
        %v2250 = vmax.f32 %v2249, 0.0
        %v2251 = vpack.c.bf16 %v2244, %v2244
        %v2252 = vpack.c.bf16 %v2250, %v2250
        %v2253 = vld [vmem:[%s7] sm:$0xf]
        %v2254 = vld [vmem:[%s7 + $0x4] sm:$0xf]
        %v2255 = vld [vmem:[%s7 + $0x8] sm:$0xf]
        %v2256 = vld [vmem:[%s7 + $0xc] sm:$0xf]
        %v2257 = vld [vmem:[%s7 + $0x10] sm:$0xf]
        %v2258 = vld [vmem:[%s7 + $0x14] sm:$0xf]
        %v2259 = vld [vmem:[%s7 + $0x18] sm:$0xf]
        %v2260 = vld [vmem:[%s7 + $0x1c] sm:$0xf]
        %v2261 = vld [vmem:[%s7 + $0x20] sm:$0xf]
        %v2262 = vld [vmem:[%s7 + $0x24] sm:$0xf]
        %v2263 = vld [vmem:[%s7 + $0x28] sm:$0xf]
        %v2264 = vld [vmem:[%s7 + $0x2c] sm:$0xf]
        %v2265 = vld [vmem:[%s7 + $0x30] sm:$0xf]
        %v2266 = vld [vmem:[%s7 + $0x34] sm:$0xf]
        %v2267 = vld [vmem:[%s7 + $0x38] sm:$0xf]
        %v2268 = vld [vmem:[%s7 + $0x3c] sm:$0xf]
        %v2269 = vld [vmem:[%s7 + $0x40] sm:$0xf]
        %v2270 = vld [vmem:[%s7 + $0x44] sm:$0xf]
        %v2271 = vld [vmem:[%s7 + $0x48] sm:$0xf]
        %v2272 = vld [vmem:[%s7 + $0x4c] sm:$0xf]
        %v2273 = vld [vmem:[%s7 + $0x50] sm:$0xf]
        %v2274 = vld [vmem:[%s7 + $0x54] sm:$0xf]
        %v2275 = vld [vmem:[%s7 + $0x58] sm:$0xf]
        %v2276 = vld [vmem:[%s7 + $0x5c] sm:$0xf]
        %v2277 = vld [vmem:[%s7 + $0x60] sm:$0xf]
        %v2278 = vld [vmem:[%s7 + $0x64] sm:$0xf]
        %v2279 = vld [vmem:[%s7 + $0x68] sm:$0xf]
        %v2280 = vld [vmem:[%s7 + $0x6c] sm:$0xf]
        %v2281 = vld [vmem:[%s7 + $0x70] sm:$0xf]
        %v2282 = vld [vmem:[%s7 + $0x74] sm:$0xf]
        %v2283 = vld [vmem:[%s7 + $0x78] sm:$0xf]
        %v2284 = vld [vmem:[%s7 + $0x7c] sm:$0xf]
        %v2285 = vld [vmem:[%s8] sm:$0x1]
        %v2287 = vperm.slane %v2285, 0
        %v2321 = vunpack.c.l.b16 %v2253
        %v2322 = vunpack.c.l.b16 %v2254
        %v2323 = vunpack.c.l.b16 %v2255
        %v2324 = vunpack.c.l.b16 %v2256
        %v2325 = vunpack.c.l.b16 %v2257
        %v2326 = vunpack.c.l.b16 %v2258
        %v2327 = vunpack.c.l.b16 %v2259
        %v2328 = vunpack.c.l.b16 %v2260
        %v2329 = vunpack.c.l.b16 %v2261
        %v2330 = vunpack.c.l.b16 %v2262
        %v2331 = vunpack.c.l.b16 %v2263
        %v2332 = vunpack.c.l.b16 %v2264
        %v2333 = vunpack.c.l.b16 %v2265
        %v2334 = vunpack.c.l.b16 %v2266
        %v2335 = vunpack.c.l.b16 %v2267
        %v2336 = vunpack.c.l.b16 %v2268
        %v2337 = vunpack.c.l.b16 %v2269
        %v2338 = vunpack.c.l.b16 %v2270
        %v2339 = vunpack.c.l.b16 %v2271
        %v2340 = vunpack.c.l.b16 %v2272
        %v2341 = vunpack.c.l.b16 %v2273
        %v2342 = vunpack.c.l.b16 %v2274
        %v2343 = vunpack.c.l.b16 %v2275
        %v2344 = vunpack.c.l.b16 %v2276
        %v2345 = vunpack.c.l.b16 %v2277
        %v2346 = vunpack.c.l.b16 %v2278
        %v2347 = vunpack.c.l.b16 %v2279
        %v2348 = vunpack.c.l.b16 %v2280
        %v2349 = vunpack.c.l.b16 %v2281
        %v2350 = vunpack.c.l.b16 %v2282
        %v2351 = vunpack.c.l.b16 %v2283
        %v2352 = vunpack.c.l.b16 %v2284
        %v2353 = vpack.c.b16 %v2322, %v2321
        %v2354 = vpack.c.b16 %v2324, %v2323
        %v2355 = vpack.c.b16 %v2326, %v2325
        %v2356 = vpack.c.b16 %v2328, %v2327
        %v2357 = vpack.c.b16 %v2330, %v2329
        %v2358 = vpack.c.b16 %v2332, %v2331
        %v2359 = vpack.c.b16 %v2334, %v2333
        %v2360 = vpack.c.b16 %v2336, %v2335
        %v2361 = vpack.c.b16 %v2338, %v2337
        %v2362 = vpack.c.b16 %v2340, %v2339
        %v2363 = vpack.c.b16 %v2342, %v2341
        %v2364 = vpack.c.b16 %v2344, %v2343
        %v2365 = vpack.c.b16 %v2346, %v2345
        %v2366 = vpack.c.b16 %v2348, %v2347
        %v2367 = vpack.c.b16 %v2350, %v2349
        %v2368 = vpack.c.b16 %v2352, %v2351
        %2385 = vmatpush.bf16.msra.mxu0 %v2360
        %2386 = vmatpush.bf16.msra.mxu0 %v2359
        %2387 = vmatpush.bf16.msra.mxu0 %v2358
        %2388 = vmatpush.bf16.msra.mxu0 %v2357
        %2389 = vmatpush.bf16.msra.mxu0 %v2356
        %2390 = vmatpush.bf16.msra.mxu0 %v2355
        %2391 = vmatpush.bf16.msra.mxu0 %v2354
        %2392 = vmatpush.bf16.msra.mxu0 %v2353
        %2393 = vmatmul.bf16.gmra.mxu0 %v2251
        %v2394 = vpop.f32.mrf.mxu0
        %v2395 = vadd.f32 %v2287, %v2394
        %v2396 = vpop.f32.mrf.mxu0
        %2397 = vdwg.mxu0
        %2398 = vmatpush.bf16.msra.mxu0 %v2368
        %2399 = vmatpush.bf16.msra.mxu0 %v2367
        %2400 = vmatpush.bf16.msra.mxu0 %v2366
        %2401 = vmatpush.bf16.msra.mxu0 %v2365
        %2402 = vmatpush.bf16.msra.mxu0 %v2364
        %2403 = vmatpush.bf16.msra.mxu0 %v2363
        %2404 = vmatpush.bf16.msra.mxu0 %v2362
        %2405 = vmatpush.bf16.msra.mxu0 %v2361
        %2406 = vmatmul.bf16.gmra.mxu0 %v2252
        %v2407 = vpop.f32.mrf.mxu0
        %v2408 = vadd.f32 %v2395, %v2407
        %v2409 = vpop.f32.mrf.mxu0
        %2410 = vdwg.mxu0
        %v2411 = vmax.f32 %v2408, 0.0
        %vm2412 = vcmask 257024
        %2413 = vst.msk [vmem:[%s376] sm:$0xf] %vm2412, %v2411
        %s2414 = sand.u32 %s227, 1
        %s2415 = scalar_lea.sflag [#allocation5], %s2414
        %s2416 = sand.u32 %s227, 1
        %s2417 = smul.addr %s2416, 4
        %s2418 = scalar_lea.vmem [#allocation9], %s2417
        // Predicated region
        $region69: #{belief_map_cnn.1} parent=55 // pred_check
          %p2419 = pneg %p237
        $region70: #{belief_map_cnn.1} parent=55 // pred_check_branch
          %2421 = sbr.rel (%p2419) target = $region72
        $region71: #{belief_map_cnn.1} parent=55 // pred_region
          %2423 = vsyncadd %s2415, 0
          %s2424 = smul.addr %s25, 4
          %s2425 = scalar_lea.hbm %s9, %s2424
          %s2427 = sshll.u32 %s2418, 4
          %s2428 = int_to_ptr.vmem [resolvable:$true] %s2427
          %s2429 = sshll.u32 %s2425, 4
          %s2430 = int_to_ptr.hbm [resolvable:$true] %s2429
          %2432 = dma.vmem_to_hbm [thread:$0]  %s2428, 64, %s2430, %s2415
        $region72: #{belief_map_cnn.1} parent=55 // pred_fallthru
          _
      $region56: #{belief_map_cnn.1} parent=5 // pred_fallthru
        _
      %p2433 = scmp.le.s32.totalorder 2, %s20
      // Predicated region
      $region73: #{belief_map_cnn.1} parent=5 // pred_check
        %p2434 = pneg %p2433
      $region74: #{belief_map_cnn.1} parent=5 // pred_check_branch
        %2436 = sbr.rel (%p2434) target = $region76
      $region75: #{belief_map_cnn.1} parent=5 // pred_region
        %s2437 = ssub.s32 %s20, 2
        // Predicated region
        $region77: #{belief_map_cnn.1} parent=75 // pred_check
          %p2438 = pneg %p243
        $region78: #{belief_map_cnn.1} parent=75 // pred_check_branch
          %2440 = sbr.rel (%p2438) target = $region80
        $region79: #{belief_map_cnn.1} parent=75 // pred_region
          %s2441 = sand.u32 %s228, 1
          %s2442 = scalar_lea.sflag [#allocation5], %s2441
          %s2443 = sand.u32 %s228, 1
          %s2444 = smul.addr %s2443, 4
          %s2445 = scalar_lea.vmem [#allocation9], %s2444
          %2447 = dma.done %s2442, 64
        $region80: #{belief_map_cnn.1} parent=75 // pred_fallthru
          _
      $region76: #{belief_map_cnn.1} parent=5 // pred_fallthru
        _
    $region6: #{belief_map_cnn.1} parent=1 // loop_footer
      %s24 = sadd.s32 1, %s20
    $region7: #{belief_map_cnn.1} parent=1 // loop_footer_branch
      %19 = sbr.rel target = $region3
    $region8: #{belief_map_cnn.1} parent=1 // loop_exit
      _
    %2448 = vsyncpa [#allocation4], 1
    %s2449 = scalar_lea.sflag [#allocation4], 1
    %2450 = vsyncpa %s2449, 1
    %2451 = vsyncpa [#allocation7], 1
    %2452 = vsyncpa [#allocation5], 1
    %s2453 = scalar_lea.sflag [#allocation5], 1
    %2454 = vsyncpa %s2453, 1

</llo_original>
